<compile_context>
chip_gen: v7x
topology: tpu7x:2x2x1
jax: 0.10.0
libtpu: 0.0.40
codegen_flags: <defaults>
</compile_context>

<pallas_src>
import jax
import jax.numpy as jnp
from jax.experimental import pallas as pl
from jax.experimental.pallas import tpu as pltpu

LANE = 128
SUBLANE = 8


def _round_up(x, m):
    return ((x + m - 1) // m) * m


def calculate_layer_units(state_dim, action_dim, total_units, num_layers):
    assert total_units % num_layers == 0
    per_unit = total_units // num_layers
    return [per_unit] * num_layers, [per_unit] * num_layers


def _init_linear(key, din, dout, dtype):
    """PyTorch nn.Linear-style init: U(-1/sqrt(din), 1/sqrt(din)); (in, out) layout."""
    kw, kb = jax.random.split(key)
    bound = 1.0 / float(din) ** 0.5
    w = jax.random.uniform(kw, (din, dout), jnp.float32, -bound, bound).astype(dtype)
    b = jax.random.uniform(kb, (1, dout), jnp.float32, -bound, bound).astype(dtype)
    return w, b


def _pad_weight(w, segments, padded_rows, padded_cols):
    """Scatter rows of an unpadded (din, u) weight into the lane-padded feature
    layout: rows land at their segment's padded column offsets, everything else
    (pad rows and pad output columns) is zero."""
    din, u = w.shape
    wp = jnp.zeros((padded_rows, padded_cols), w.dtype)
    lo = 0
    for (pstart, width) in segments:
        wp = wp.at[pstart:pstart + width, :u].set(w[lo:lo + width, :])
        lo += width
    assert lo == din, (lo, din)
    return wp


def _pad_bias(b, padded_cols):
    u = b.shape[1]
    bp = jnp.zeros((1, padded_cols), b.dtype)
    return bp.at[:, :u].set(b)


# ---------------------------------------------------------------------------
# Fused Pallas kernel
# ---------------------------------------------------------------------------

def _make_fused_kernel(*, s_pad, a_pad, block_dims, out_in_pad, skip_action,
                       n_state_blocks):
    """block_dims: list of (input_prefix_pad, output_pad) per DenseNet block in
    execution order (state blocks first, then action blocks)."""
    n_blocks = len(block_dims)

    def kernel(*refs):
        i = 0
        x_ref = refs[i]; i += 1
        a_ref = None
        if not skip_action:
            a_ref = refs[i]; i += 1
        params = []
        for _ in range(n_blocks):
            params.append((refs[i], refs[i + 1])); i += 2
        w_out_ref, b_out_ref = refs[i], refs[i + 1]; i += 2
        o_ref = refs[i]; i += 1
        feat = refs[i]  # VMEM scratch: (tb, feat_pad), resident all layers

        # State input -> columns [0, s_pad).  Pad columns are already zero
        # (host-side zero pad), so they contribute nothing downstream.
        feat[:, 0:s_pad] = x_ref[...]

        def run_block(w_ref, b_ref, in_w, out_w, off):
            xin = feat[:, 0:in_w]                       # static, lane-aligned slice
            h = (jnp.dot(xin, w_ref[...], preferred_element_type=jnp.float32)
                 + b_ref[...].astype(jnp.float32))
            h = h * jax.nn.sigmoid(h)                   # Swish; sigmoid -> EUP slot
            feat[:, off:off + out_w] = h.astype(feat.dtype)

        off = s_pad
        for bi in range(n_state_blocks):
            in_w, out_w = block_dims[bi]
            assert in_w == off
            run_block(params[bi][0], params[bi][1], in_w, out_w, off)
            off += out_w

        if not skip_action:
            # Inject actions directly into the resident feature buffer
            # (replaces the XLA-level torch.cat([features, actions], 1)).
            feat[:, off:off + a_pad] = a_ref[...]
            off += a_pad
            for bi in range(n_state_blocks, n_blocks):
                in_w, out_w = block_dims[bi]
                assert in_w == off
                run_block(params[bi][0], params[bi][1], in_w, out_w, off)
                off += out_w

        out = (jnp.dot(feat[:, 0:out_in_pad], w_out_ref[...],
                       preferred_element_type=jnp.float32)
               + b_out_ref[...].astype(jnp.float32))
        o_ref[...] = out.astype(o_ref.dtype)

    return kernel


# ---------------------------------------------------------------------------
# OFENet (params + glue in JAX, compute fused in one Pallas kernel)
# ---------------------------------------------------------------------------

class OFENetPallas:
    def __init__(self, key, dim_state, dim_action, dim_output,
                 total_units, num_layers, skip_action_branch=False,
                 param_dtype=jnp.float32):
        self.dim_state = dim_state
        self.dim_action = dim_action
        self.dim_output = dim_output
        self.total_units = total_units
        self.num_layers = num_layers
        self._skip_action_branch = skip_action_branch
        self.param_dtype = param_dtype  # bf16 here halves DMA/VMEM on v6e/v7x

        state_units, action_units = calculate_layer_units(
            dim_state, dim_action, total_units, num_layers)

        self._dim_state_features = dim_state + sum(state_units)
        self._dim_state_action_features = (
            self._dim_state_features + dim_action + sum(action_units))

        # ------- lane-padded feature layout --------------------------------
        self.s_pad = _round_up(dim_state, LANE)
        self.a_pad = _round_up(dim_action, LANE)
        self.o_pad = _round_up(dim_output, LANE)

        keys = jax.random.split(key, len(state_units) + len(action_units) + 1)
        ki = 0

        segments = [(0, dim_state)]       # (padded column start, logical width)
        padded_off = self.s_pad
        logical_in = dim_state

        self.block_params = []            # padded (W, b) in execution order
        self.block_dims = []              # (input_prefix_pad, output_pad)

        def add_block(u):
            nonlocal padded_off, logical_in, ki
            u_pad = _round_up(u, LANE)
            w, b = _init_linear(keys[ki], logical_in, u, param_dtype); ki += 1
            self.block_params.append((_pad_weight(w, segments, padded_off, u_pad),
                                      _pad_bias(b, u_pad)))
            self.block_dims.append((padded_off, u_pad))
            segments.append((padded_off, u))
            padded_off += u_pad
            logical_in += u

        for u in state_units:
            add_block(u)
        self.n_state_blocks = len(state_units)

        if not skip_action_branch:
            segments.append((padded_off, dim_action))
            padded_off += self.a_pad
            logical_in += dim_action
            for u in action_units:
                add_block(u)
        # (When skip_action_branch, action blocks exist in PyTorch but are
        #  unused by forward; we simply don't materialize them.)

        self.feat_pad = padded_off
        self.out_in_pad = padded_off      # prefix width feeding out_layer

        w_out, b_out = _init_linear(keys[ki], logical_in, dim_output, param_dtype)
        self.out_params = (_pad_weight(w_out, segments, padded_off, self.o_pad),
                           _pad_bias(b_out, self.o_pad))

        self._call_cache = {}

    # -------------------------------------------------------------------- #
    @staticmethod
    def flatten_dict(observations):
        """DictExtractor: flatten every entry and concat along feature axis."""
        parts = []
        for key in observations:  # dict preserves insertion order (as ModuleDict)
            x = observations[key]
            parts.append(jnp.asarray(x, jnp.float32).reshape(x.shape[0], -1))
        return jnp.concatenate(parts, axis=1)

    # -------------------------------------------------------------------- #
    def _build_call(self, b_pad, tb):
        cache_key = (b_pad, tb)
        if cache_key in self._call_cache:
            return self._call_cache[cache_key]

        kernel = _make_fused_kernel(
            s_pad=self.s_pad, a_pad=self.a_pad, block_dims=self.block_dims,
            out_in_pad=self.out_in_pad, skip_action=self._skip_action_branch,
            n_state_blocks=self.n_state_blocks)

        row = lambda i: (i, 0)      # batch-tiled operands
        const = lambda i: (0, 0)    # weights/biases: same block every step (resident)

        in_specs = [pl.BlockSpec((tb, self.s_pad), row)]
        if not self._skip_action_branch:
            in_specs.append(pl.BlockSpec((tb, self.a_pad), row))
        for (w, b) in self.block_params:
            in_specs.append(pl.BlockSpec(w.shape, const))
            in_specs.append(pl.BlockSpec(b.shape, const))
        w_out, b_out = self.out_params
        in_specs.append(pl.BlockSpec(w_out.shape, const))
        in_specs.append(pl.BlockSpec(b_out.shape, const))

        out_specs = pl.BlockSpec((tb, self.o_pad), row)

        # Advisory cost estimate for XLA's scheduler.
        flops = 0
        for (in_w, out_w) in self.block_dims:
            flops += 2 * b_pad * in_w * out_w
        flops += 2 * b_pad * self.out_in_pad * self.o_pad
        transcendentals = b_pad * sum(ow for (_, ow) in self.block_dims)
        param_bytes = sum(int(w.size) * w.dtype.itemsize + int(b.size) * b.dtype.itemsize
                          for (w, b) in self.block_params)
        param_bytes += int(w_out.size) * w_out.dtype.itemsize
        param_bytes += int(b_out.size) * b_out.dtype.itemsize
        act_bytes = jnp.dtype(self.param_dtype).itemsize * b_pad * (
            self.s_pad + (0 if self._skip_action_branch else self.a_pad))
        out_bytes = 4 * b_pad * self.o_pad
        cost = pl.CostEstimate(flops=flops, transcendentals=transcendentals,
                               bytes_accessed=param_bytes + act_bytes + out_bytes)

        call = pl.pallas_call(
            kernel,
            out_shape=jax.ShapeDtypeStruct((b_pad, self.o_pad), jnp.float32),
            grid_spec=pltpu.PrefetchScalarGridSpec(
                num_scalar_prefetch=0,
                grid=(b_pad // tb,),
                in_specs=in_specs,
                out_specs=out_specs,
                scratch_shapes=[pltpu.VMEM((tb, self.feat_pad), self.param_dtype)],
            ),
            compiler_params=pltpu.CompilerParams(
                dimension_semantics=("parallel",),   # shard batch across TCs (v7x)
                vmem_limit_bytes=32 * 1024 * 1024,
            ),
            cost_estimate=cost,
        )
        self._call_cache[cache_key] = call
        return call

    # -------------------------------------------------------------------- #
    def forward(self, inputs):
        states, actions = inputs
        x = self.flatten_dict(states)                       # (B, dim_state), f32
        B = x.shape[0]

        tb = min(128, _round_up(B, SUBLANE))
        b_pad = _round_up(B, tb)

        x = jnp.pad(x.astype(self.param_dtype),
                    ((0, b_pad - B), (0, self.s_pad - self.dim_state)))
        args = [x]
        if not self._skip_action_branch:
            a = jnp.pad(jnp.asarray(actions, self.param_dtype),
                        ((0, b_pad - B), (0, self.a_pad - self.dim_action)))
            args.append(a)
        for (w, b) in self.block_params:
            args.extend([w, b])
        args.extend(self.out_params)

        out = self._build_call(b_pad, tb)(*args)
        return out[:B, :self.dim_output]


# ---------------------------------------------------------------------------
# Pure-JAX reference (same padded layout; pads are zero so it equals the
# logical OFENet forward) — used only as a sanity check in the demo.
# ---------------------------------------------------------------------------

def _reference_forward(net, states, actions):
    hi = jax.lax.Precision.HIGHEST
    x = net.flatten_dict(states).astype(jnp.float32)
    B = x.shape[0]
    feat = jnp.zeros((B, net.feat_pad), jnp.float32)
    feat = feat.at[:, :net.dim_state].set(x)
    off = net.s_pad
    bi = 0
    for (in_w, out_w) in net.block_dims[:net.n_state_blocks]:
        w, b = net.block_params[bi]; bi += 1
        h = jnp.dot(feat[:, :in_w], w.astype(jnp.float32), precision=hi) + b.astype(jnp.float32)
        h = h * jax.nn.sigmoid(h)
        feat = feat.at[:, off:off + out_w].set(h)
        off += out_w
    if not net._skip_action_branch:
        a = jnp.asarray(actions, jnp.float32)
        feat = feat.at[:, off:off + net.dim_action].set(a)
        off += net.a_pad
        for (in_w, out_w) in net.block_dims[net.n_state_blocks:]:
            w, b = net.block_params[bi]; bi += 1
            h = jnp.dot(feat[:, :in_w], w.astype(jnp.float32), precision=hi) + b.astype(jnp.float32)
            h = h * jax.nn.sigmoid(h)
            feat = feat.at[:, off:off + out_w].set(h)
            off += out_w
    w_out, b_out = net.out_params
    out = jnp.dot(feat[:, :net.out_in_pad], w_out.astype(jnp.float32), precision=hi)
    out = out + b_out.astype(jnp.float32)
    return out[:, :net.dim_output]


# ---------------------------------------------------------------------------
# Demo / smoke test
# ---------------------------------------------------------------------------

if __name__ == "__main__":
    key = jax.random.PRNGKey(0)
    k_obs1, k_obs2, k_act, k_params = jax.random.split(key, 4)

    batch = 8
    # observation space with two entries: "obs1" (4,4) -> 16, "obs2" (16,) -> 16
    obs = {
        "obs1": jax.random.normal(k_obs1, (batch, 4, 4), jnp.float32),
        "obs2": jax.random.normal(k_obs2, (batch, 16), jnp.float32),
    }
    dim_state = 4 * 4 + 16          # 32
    dim_action = 8
    actions = jax.random.normal(k_act, (batch, dim_action), jnp.float32)

    total_units = 32
    num_layers = 2
    dim_output = 16

    net = OFENetPallas(
        k_params,
        dim_state=dim_state,
        dim_action=dim_action,
        dim_output=dim_output,
        total_units=total_units,
        num_layers=num_layers,
    )
    # TODO(synk): train_ofe/test_ofe (Adam optimizer, aux-task losses, metrics)
    # are host-side training logic and are not translated to Pallas.

    values = net.forward([obs, actions])
    values = jax.block_until_ready(values)

    assert values.shape == (batch, dim_output), values.shape
    assert values.dtype == jnp.float32
    assert bool(jnp.all(jnp.isfinite(values)))

    # Numerical sanity check against a pure-JAX reference of the same network.
    ref = _reference_forward(net, obs, actions)
    assert jnp.allclose(values, ref, atol=5e-2, rtol=5e-2), \
        float(jnp.max(jnp.abs(values - ref)))

    # Feature-dim bookkeeping matches OFENet.__init__
    assert net._dim_state_features == total_units + dim_state
    assert net._dim_state_action_features == (
        total_units + dim_state + dim_action + total_units)

    print("KERNEL_OK")
</pallas_src>

<mosaic_0001>
module attributes {stable_mosaic.version = 11 : i64} {
  func.func @kernel(%arg0: i32, %arg1: memref<8x128xf32, #tpu.memory_space<vmem>>, %arg2: memref<8x128xf32, #tpu.memory_space<vmem>>, %arg3: memref<128x128xf32, #tpu.memory_space<vmem>>, %arg4: memref<1x128xf32, #tpu.memory_space<vmem>>, %arg5: memref<256x128xf32, #tpu.memory_space<vmem>>, %arg6: memref<1x128xf32, #tpu.memory_space<vmem>>, %arg7: memref<512x128xf32, #tpu.memory_space<vmem>>, %arg8: memref<1x128xf32, #tpu.memory_space<vmem>>, %arg9: memref<640x128xf32, #tpu.memory_space<vmem>>, %arg10: memref<1x128xf32, #tpu.memory_space<vmem>>, %arg11: memref<768x128xf32, #tpu.memory_space<vmem>>, %arg12: memref<1x128xf32, #tpu.memory_space<vmem>>, %arg13: memref<8x128xf32, #tpu.memory_space<vmem>>, %arg14: memref<8x768xf32, #tpu.memory_space<vmem>>) attributes {dimension_semantics = [#tpu.dimension_semantics<parallel>], iteration_bounds = array<i64: 1>, scalar_prefetch = 0 : i64, scratch_operands = 1 : i64, tpu.core_type = #tpu.core_type<tc>, window_params = [{transform_indices = @transform_0, window_bounds = array<i64: 8, 128>}, {transform_indices = @transform_1, window_bounds = array<i64: 8, 128>}, {pipeline_mode = #tpu.pipeline_mode<synchronous>, transform_indices = @transform_2, window_bounds = array<i64: 128, 128>}, {pipeline_mode = #tpu.pipeline_mode<synchronous>, transform_indices = @transform_3, window_bounds = array<i64: 1, 128>}, {pipeline_mode = #tpu.pipeline_mode<synchronous>, transform_indices = @transform_4, window_bounds = array<i64: 256, 128>}, {pipeline_mode = #tpu.pipeline_mode<synchronous>, transform_indices = @transform_5, window_bounds = array<i64: 1, 128>}, {pipeline_mode = #tpu.pipeline_mode<synchronous>, transform_indices = @transform_6, window_bounds = array<i64: 512, 128>}, {pipeline_mode = #tpu.pipeline_mode<synchronous>, transform_indices = @transform_7, window_bounds = array<i64: 1, 128>}, {pipeline_mode = #tpu.pipeline_mode<synchronous>, transform_indices = @transform_8, window_bounds = array<i64: 640, 128>}, {pipeline_mode = #tpu.pipeline_mode<synchronous>, transform_indices = @transform_9, window_bounds = array<i64: 1, 128>}, {pipeline_mode = #tpu.pipeline_mode<synchronous>, transform_indices = @transform_10, window_bounds = array<i64: 768, 128>}, {pipeline_mode = #tpu.pipeline_mode<synchronous>, transform_indices = @transform_11, window_bounds = array<i64: 1, 128>}, {transform_indices = @transform_12, window_bounds = array<i64: 8, 128>}]} {
    %c0 = arith.constant 0 : index
    %c0_0 = arith.constant 0 : index
    %0 = vector.load %arg1[%c0, %c0_0] : memref<8x128xf32, #tpu.memory_space<vmem>>, vector<8x128xf32>
    %c0_1 = arith.constant 0 : index
    %c0_2 = arith.constant 0 : index
    %1 = vector.load %arg14[%c0_1, %c0_2] : memref<8x768xf32, #tpu.memory_space<vmem>>, vector<8x128xf32>
    tpu.vector_store %arg14[%c0_1, %c0_2], %0 {strides = array<i32>} : memref<8x768xf32, #tpu.memory_space<vmem>>, vector<8x128xf32>,
    %c0_3 = arith.constant 0 : index
    %c0_4 = arith.constant 0 : index
    %2 = vector.load %arg14[%c0_3, %c0_4] : memref<8x768xf32, #tpu.memory_space<vmem>>, vector<8x128xf32>
    %c0_5 = arith.constant 0 : index
    %c0_6 = arith.constant 0 : index
    %3 = vector.load %arg3[%c0_5, %c0_6] : memref<128x128xf32, #tpu.memory_space<vmem>>, vector<128x128xf32>
    %cst = arith.constant dense<0.000000e+00> : vector<8x128xf32>
    %4 = tpu.matmul %2, %3, %cst {dimension_numbers = #tpu.dot_dimension_numbers<[1], [0], [0], [1], [0, 0, 1, 1], [], []>} : vector<8x128xf32>, vector<128x128xf32>, vector<8x128xf32> -> vector<8x128xf32>
    %c0_7 = arith.constant 0 : index
    %c0_8 = arith.constant 0 : index
    %5 = vector.load %arg4[%c0_7, %c0_8] : memref<1x128xf32, #tpu.memory_space<vmem>>, vector<1x128xf32>
    %6 = vector.broadcast %5 : vector<1x128xf32> to vector<8x128xf32>
    %7 = arith.addf %4, %6 : vector<8x128xf32>
    %8 = arith.negf %7 : vector<8x128xf32>
    %9 = math.exp %8 : vector<8x128xf32>
    %cst_9 = arith.constant 1.000000e+00 : f32
    %10 = vector.broadcast %cst_9 : f32 to vector<8x128xf32>
    %11 = arith.addf %10, %9 : vector<8x128xf32>
    %12 = arith.divf %10, %11 : vector<8x128xf32>
    %13 = arith.mulf %7, %12 : vector<8x128xf32>
    %c0_10 = arith.constant 0 : index
    %c128 = arith.constant 128 : index
    %14 = vector.load %arg14[%c0_10, %c128] : memref<8x768xf32, #tpu.memory_space<vmem>>, vector<8x128xf32>
    tpu.vector_store %arg14[%c0_10, %c128], %13 {strides = array<i32>} : memref<8x768xf32, #tpu.memory_space<vmem>>, vector<8x128xf32>,
    %c0_11 = arith.constant 0 : index
    %c0_12 = arith.constant 0 : index
    %15 = vector.load %arg14[%c0_11, %c0_12] : memref<8x768xf32, #tpu.memory_space<vmem>>, vector<8x256xf32>
    %c0_13 = arith.constant 0 : index
    %c0_14 = arith.constant 0 : index
    %16 = vector.load %arg5[%c0_13, %c0_14] : memref<256x128xf32, #tpu.memory_space<vmem>>, vector<256x128xf32>
    %cst_15 = arith.constant dense<0.000000e+00> : vector<8x128xf32>
    %17 = tpu.matmul %15, %16, %cst_15 {dimension_numbers = #tpu.dot_dimension_numbers<[1], [0], [0], [1], [0, 0, 1, 1], [], []>} : vector<8x256xf32>, vector<256x128xf32>, vector<8x128xf32> -> vector<8x128xf32>
    %c0_16 = arith.constant 0 : index
    %c0_17 = arith.constant 0 : index
    %18 = vector.load %arg6[%c0_16, %c0_17] : memref<1x128xf32, #tpu.memory_space<vmem>>, vector<1x128xf32>
    %19 = vector.broadcast %18 : vector<1x128xf32> to vector<8x128xf32>
    %20 = arith.addf %17, %19 : vector<8x128xf32>
    %21 = arith.negf %20 : vector<8x128xf32>
    %22 = math.exp %21 : vector<8x128xf32>
    %cst_18 = arith.constant 1.000000e+00 : f32
    %23 = vector.broadcast %cst_18 : f32 to vector<8x128xf32>
    %24 = arith.addf %23, %22 : vector<8x128xf32>
    %25 = arith.divf %23, %24 : vector<8x128xf32>
    %26 = arith.mulf %20, %25 : vector<8x128xf32>
    %c0_19 = arith.constant 0 : index
    %c256 = arith.constant 256 : index
    %27 = vector.load %arg14[%c0_19, %c256] : memref<8x768xf32, #tpu.memory_space<vmem>>, vector<8x128xf32>
    tpu.vector_store %arg14[%c0_19, %c256], %26 {strides = array<i32>} : memref<8x768xf32, #tpu.memory_space<vmem>>, vector<8x128xf32>,
    %c0_20 = arith.constant 0 : index
    %c0_21 = arith.constant 0 : index
    %28 = vector.load %arg2[%c0_20, %c0_21] : memref<8x128xf32, #tpu.memory_space<vmem>>, vector<8x128xf32>
    %c0_22 = arith.constant 0 : index
    %c384 = arith.constant 384 : index
    %29 = vector.load %arg14[%c0_22, %c384] : memref<8x768xf32, #tpu.memory_space<vmem>>, vector<8x128xf32>
    tpu.vector_store %arg14[%c0_22, %c384], %28 {strides = array<i32>} : memref<8x768xf32, #tpu.memory_space<vmem>>, vector<8x128xf32>,
    %c0_23 = arith.constant 0 : index
    %c0_24 = arith.constant 0 : index
    %30 = vector.load %arg14[%c0_23, %c0_24] : memref<8x768xf32, #tpu.memory_space<vmem>>, vector<8x512xf32>
    %c0_25 = arith.constant 0 : index
    %c0_26 = arith.constant 0 : index
    %31 = vector.load %arg7[%c0_25, %c0_26] : memref<512x128xf32, #tpu.memory_space<vmem>>, vector<512x128xf32>
    %cst_27 = arith.constant dense<0.000000e+00> : vector<8x128xf32>
    %32 = tpu.matmul %30, %31, %cst_27 {dimension_numbers = #tpu.dot_dimension_numbers<[1], [0], [0], [1], [0, 0, 1, 1], [], []>} : vector<8x512xf32>, vector<512x128xf32>, vector<8x128xf32> -> vector<8x128xf32>
    %c0_28 = arith.constant 0 : index
    %c0_29 = arith.constant 0 : index
    %33 = vector.load %arg8[%c0_28, %c0_29] : memref<1x128xf32, #tpu.memory_space<vmem>>, vector<1x128xf32>
    %34 = vector.broadcast %33 : vector<1x128xf32> to vector<8x128xf32>
    %35 = arith.addf %32, %34 : vector<8x128xf32>
    %36 = arith.negf %35 : vector<8x128xf32>
    %37 = math.exp %36 : vector<8x128xf32>
    %cst_30 = arith.constant 1.000000e+00 : f32
    %38 = vector.broadcast %cst_30 : f32 to vector<8x128xf32>
    %39 = arith.addf %38, %37 : vector<8x128xf32>
    %40 = arith.divf %38, %39 : vector<8x128xf32>
    %41 = arith.mulf %35, %40 : vector<8x128xf32>
    %c0_31 = arith.constant 0 : index
    %c512 = arith.constant 512 : index
    %42 = vector.load %arg14[%c0_31, %c512] : memref<8x768xf32, #tpu.memory_space<vmem>>, vector<8x128xf32>
    tpu.vector_store %arg14[%c0_31, %c512], %41 {strides = array<i32>} : memref<8x768xf32, #tpu.memory_space<vmem>>, vector<8x128xf32>,
    %c0_32 = arith.constant 0 : index
    %c0_33 = arith.constant 0 : index
    %43 = vector.load %arg14[%c0_32, %c0_33] : memref<8x768xf32, #tpu.memory_space<vmem>>, vector<8x640xf32>
    %c0_34 = arith.constant 0 : index
    %c0_35 = arith.constant 0 : index
    %44 = vector.load %arg9[%c0_34, %c0_35] : memref<640x128xf32, #tpu.memory_space<vmem>>, vector<640x128xf32>
    %cst_36 = arith.constant dense<0.000000e+00> : vector<8x128xf32>
    %45 = tpu.matmul %43, %44, %cst_36 {dimension_numbers = #tpu.dot_dimension_numbers<[1], [0], [0], [1], [0, 0, 1, 1], [], []>} : vector<8x640xf32>, vector<640x128xf32>, vector<8x128xf32> -> vector<8x128xf32>
    %c0_37 = arith.constant 0 : index
    %c0_38 = arith.constant 0 : index
    %46 = vector.load %arg10[%c0_37, %c0_38] : memref<1x128xf32, #tpu.memory_space<vmem>>, vector<1x128xf32>
    %47 = vector.broadcast %46 : vector<1x128xf32> to vector<8x128xf32>
    %48 = arith.addf %45, %47 : vector<8x128xf32>
    %49 = arith.negf %48 : vector<8x128xf32>
    %50 = math.exp %49 : vector<8x128xf32>
    %cst_39 = arith.constant 1.000000e+00 : f32
    %51 = vector.broadcast %cst_39 : f32 to vector<8x128xf32>
    %52 = arith.addf %51, %50 : vector<8x128xf32>
    %53 = arith.divf %51, %52 : vector<8x128xf32>
    %54 = arith.mulf %48, %53 : vector<8x128xf32>
    %c0_40 = arith.constant 0 : index
    %c640 = arith.constant 640 : index
    %55 = vector.load %arg14[%c0_40, %c640] : memref<8x768xf32, #tpu.memory_space<vmem>>, vector<8x128xf32>
    tpu.vector_store %arg14[%c0_40, %c640], %54 {strides = array<i32>} : memref<8x768xf32, #tpu.memory_space<vmem>>, vector<8x128xf32>,
    %c0_41 = arith.constant 0 : index
    %c0_42 = arith.constant 0 : index
    %56 = vector.load %arg14[%c0_41, %c0_42] : memref<8x768xf32, #tpu.memory_space<vmem>>, vector<8x768xf32>
    %c0_43 = arith.constant 0 : index
    %c0_44 = arith.constant 0 : index
    %57 = vector.load %arg11[%c0_43, %c0_44] : memref<768x128xf32, #tpu.memory_space<vmem>>, vector<768x128xf32>
    %cst_45 = arith.constant dense<0.000000e+00> : vector<8x128xf32>
    %58 = tpu.matmul %56, %57, %cst_45 {dimension_numbers = #tpu.dot_dimension_numbers<[1], [0], [0], [1], [0, 0, 1, 1], [], []>} : vector<8x768xf32>, vector<768x128xf32>, vector<8x128xf32> -> vector<8x128xf32>
    %c0_46 = arith.constant 0 : index
    %c0_47 = arith.constant 0 : index
    %59 = vector.load %arg12[%c0_46, %c0_47] : memref<1x128xf32, #tpu.memory_space<vmem>>, vector<1x128xf32>
    %60 = vector.broadcast %59 : vector<1x128xf32> to vector<8x128xf32>
    %61 = arith.addf %58, %60 : vector<8x128xf32>
    %c0_48 = arith.constant 0 : index
    %c0_49 = arith.constant 0 : index
    %62 = vector.load %arg13[%c0_48, %c0_49] : memref<8x128xf32, #tpu.memory_space<vmem>>, vector<8x128xf32>
    tpu.vector_store %arg13[%c0_48, %c0_49], %61 {strides = array<i32>} : memref<8x128xf32, #tpu.memory_space<vmem>>, vector<8x128xf32>,
    return
  }
  func.func @transform_0(%arg0: i32) -> (i32, i32) {
    %c0_i32 = arith.constant 0 : i32
    %c0_i32_0 = arith.constant 0 : i32
    return %arg0, %c0_i32 : i32, i32
  }
  func.func @transform_1(%arg0: i32) -> (i32, i32) {
    %c0_i32 = arith.constant 0 : i32
    %c0_i32_0 = arith.constant 0 : i32
    return %arg0, %c0_i32 : i32, i32
  }
  func.func @transform_2(%arg0: i32) -> (i32, i32) {
    %c0_i32 = arith.constant 0 : i32
    %c0_i32_0 = arith.constant 0 : i32
    %c0_i32_1 = arith.constant 0 : i32
    return %c0_i32, %c0_i32_0 : i32, i32
  }
  func.func @transform_3(%arg0: i32) -> (i32, i32) {
    %c0_i32 = arith.constant 0 : i32
    %c0_i32_0 = arith.constant 0 : i32
    %c0_i32_1 = arith.constant 0 : i32
    return %c0_i32, %c0_i32_0 : i32, i32
  }
  func.func @transform_4(%arg0: i32) -> (i32, i32) {
    %c0_i32 = arith.constant 0 : i32
    %c0_i32_0 = arith.constant 0 : i32
    %c0_i32_1 = arith.constant 0 : i32
    return %c0_i32, %c0_i32_0 : i32, i32
  }
  func.func @transform_5(%arg0: i32) -> (i32, i32) {
    %c0_i32 = arith.constant 0 : i32
    %c0_i32_0 = arith.constant 0 : i32
    %c0_i32_1 = arith.constant 0 : i32
    return %c0_i32, %c0_i32_0 : i32, i32
  }
  func.func @transform_6(%arg0: i32) -> (i32, i32) {
    %c0_i32 = arith.constant 0 : i32
    %c0_i32_0 = arith.constant 0 : i32
    %c0_i32_1 = arith.constant 0 : i32
    return %c0_i32, %c0_i32_0 : i32, i32
  }
  func.func @transform_7(%arg0: i32) -> (i32, i32) {
    %c0_i32 = arith.constant 0 : i32
    %c0_i32_0 = arith.constant 0 : i32
    %c0_i32_1 = arith.constant 0 : i32
    return %c0_i32, %c0_i32_0 : i32, i32
  }
  func.func @transform_8(%arg0: i32) -> (i32, i32) {
    %c0_i32 = arith.constant 0 : i32
    %c0_i32_0 = arith.constant 0 : i32
    %c0_i32_1 = arith.constant 0 : i32
    return %c0_i32, %c0_i32_0 : i32, i32
  }
  func.func @transform_9(%arg0: i32) -> (i32, i32) {
    %c0_i32 = arith.constant 0 : i32
    %c0_i32_0 = arith.constant 0 : i32
    %c0_i32_1 = arith.constant 0 : i32
    return %c0_i32, %c0_i32_0 : i32, i32
  }
  func.func @transform_10(%arg0: i32) -> (i32, i32) {
    %c0_i32 = arith.constant 0 : i32
    %c0_i32_0 = arith.constant 0 : i32
    %c0_i32_1 = arith.constant 0 : i32
    return %c0_i32, %c0_i32_0 : i32, i32
  }
  func.func @transform_11(%arg0: i32) -> (i32, i32) {
    %c0_i32 = arith.constant 0 : i32
    %c0_i32_0 = arith.constant 0 : i32
    %c0_i32_1 = arith.constant 0 : i32
    return %c0_i32, %c0_i32_0 : i32, i32
  }
  func.func @transform_12(%arg0: i32) -> (i32, i32) {
    %c0_i32 = arith.constant 0 : i32
    %c0_i32_0 = arith.constant 0 : i32
    return %arg0, %c0_i32 : i32, i32
  }
}

</mosaic_0001>

<llo_original>
// kernel: tpu_custom_call.1
$region0: #{tpu_custom_call.1}
  #allocation0 [shape = 'u32[]', space=smem, size = 0x4, offset = 0x4, fixed_abs, tag = 'smem constant byte address 0x4 - core index']
  #allocation1 [shape = 'u32[144,128]{1,0:T(1,128)}', space=vmem, size = 0x12000, scoped, tag = 'internal scratch']
  #allocation2 [shape = 'f32[8,768]{1,0:T(8,128)}', space=vmem, size = 0x6000, scoped, tag = 'scratch operand']
  %s0 = inlined_call_operand.hbm [shape: f32[8,128], index: 0, kind: input, shape index: {}]
  %s1 = inlined_call_operand.hbm [shape: f32[8,128], index: 1, kind: input, shape index: {}]
  %s2 = inlined_call_operand.hbm [shape: f32[128,128], index: 2, kind: input, shape index: {}]
  %s3 = inlined_call_operand.vmem [shape: f32[1,128], index: 3, kind: input, shape index: {}]
  %s4 = inlined_call_operand.hbm [shape: f32[256,128], index: 4, kind: input, shape index: {}]
  %s5 = inlined_call_operand.vmem [shape: f32[1,128], index: 5, kind: input, shape index: {}]
  %s6 = inlined_call_operand.hbm [shape: f32[512,128], index: 6, kind: input, shape index: {}]
  %s7 = inlined_call_operand.vmem [shape: f32[1,128], index: 7, kind: input, shape index: {}]
  %s8 = inlined_call_operand.hbm [shape: f32[640,128], index: 8, kind: input, shape index: {}]
  %s9 = inlined_call_operand.vmem [shape: f32[1,128], index: 9, kind: input, shape index: {}]
  %s10 = inlined_call_operand.hbm [shape: f32[768,128], index: 10, kind: input, shape index: {}]
  %s11 = inlined_call_operand.vmem [shape: f32[1,128], index: 11, kind: input, shape index: {}]
  %s12 = inlined_call_operand.hbm [shape: f32[8,128], index: 12, kind: output, shape index: {}]
  %s13 = sld [smem:[#allocation0]]
  $region86: #{tpu_custom_call.1} parent=0
    _
  %s15 = ssub.s32 1, %s13
  %s16 = scalar_select 0, %s15, %s13
  $region1: #{tpu_custom_call.1} parent=0
    #allocation3 [shape = 'u8[4096]{0}', space=vmem, size = 0x1000, scoped, tag = 'input window, operand 0, single buffered']
    #allocation4 [shape = 's32[1]{0}', space=sflag, size = 0x4, scoped, tag = 'scoped memory for tpu_custom_call.1']
    #allocation5 [shape = 's32[1]{0}', space=sflag, size = 0x4, scoped, tag = 'scoped memory for tpu_custom_call.1']
    #allocation6 [shape = 'u8[4096]{0}', space=vmem, size = 0x1000, scoped, tag = 'input window, operand 1, single buffered']
    #allocation7 [shape = 's32[1]{0}', space=sflag, size = 0x4, scoped, tag = 'scoped memory for tpu_custom_call.1']
    #allocation8 [shape = 'u8[65536]{0}', space=vmem, size = 0x10000, scoped, tag = 'input window, operand 2, single buffered']
    #allocation9 [shape = 'u8[131072]{0}', space=vmem, size = 0x20000, scoped, tag = 'input window, operand 4, single buffered']
    #allocation10 [shape = 's32[1]{0}', space=sflag, size = 0x4, scoped, tag = 'scoped memory for tpu_custom_call.1']
    #allocation11 [shape = 'u8[262144]{0}', space=vmem, size = 0x40000, scoped, tag = 'input window, operand 6, single buffered']
    #allocation12 [shape = 'u8[327680]{0}', space=vmem, size = 0x50000, scoped, tag = 'input window, operand 8, single buffered']
    #allocation13 [shape = 's32[1]{0}', space=sflag, size = 0x4, scoped, tag = 'scoped memory for tpu_custom_call.1']
    #allocation14 [shape = 'u8[393216]{0}', space=vmem, size = 0x60000, scoped, tag = 'input window, operand 10, single buffered']
    #allocation15 [shape = 'u8[4096]{0}', space=vmem, size = 0x1000, scoped, tag = 'output window, operand 0, single buffered']
    %17 = vsyncpa [#allocation4], 0
    %18 = vsyncpa [#allocation7], 0
    %19 = vsyncpa [#allocation10], 0
    %20 = vsyncpa [#allocation13], 0
    %21 = vsyncpa [#allocation5], 0
    // Predicated region
    $region2: #{tpu_custom_call.1} parent=1 // pred_check
      _
    $region3: #{tpu_custom_call.1} parent=1 // pred_check_branch
      %23 = sbr.rel (0) target = $region5
    $region4: #{tpu_custom_call.1} parent=1 // pred_region
      %s25 = ssub.s32 128, 128
      %26 = vsyncadd [#allocation4], %s25
      %s28 = sshll.u32 [#allocation3], 4
      %s29 = int_to_ptr.vmem [resolvable:$true] %s28
      %31 = dma.hbm_to_vmem [thread:$0]  %s0, 128, %s29, [#allocation4]
    $region5: #{tpu_custom_call.1} parent=1 // pred_fallthru
      _
    // Predicated region
    $region6: #{tpu_custom_call.1} parent=1 // pred_check
      _
    $region7: #{tpu_custom_call.1} parent=1 // pred_check_branch
      %33 = sbr.rel (0) target = $region9
    $region8: #{tpu_custom_call.1} parent=1 // pred_region
      %s35 = ssub.s32 128, 128
      %36 = vsyncadd [#allocation7], %s35
      %s38 = sshll.u32 [#allocation6], 4
      %s39 = int_to_ptr.vmem [resolvable:$true] %s38
      %41 = dma.hbm_to_vmem [thread:$0]  %s1, 128, %s39, [#allocation7]
    $region9: #{tpu_custom_call.1} parent=1 // pred_fallthru
      _
    // Predicated region
    $region10: #{tpu_custom_call.1} parent=1 // pred_check
      _
    $region11: #{tpu_custom_call.1} parent=1 // pred_check_branch
      %43 = sbr.rel (0) target = $region13
    $region12: #{tpu_custom_call.1} parent=1 // pred_region
      %s45 = ssub.s32 2048, 2048
      %46 = vsyncadd [#allocation7], %s45
      %s47 = sshll.u32 [#allocation8], 4
      %s48 = int_to_ptr.vmem [resolvable:$true] %s47
      %53 = dma.hbm_to_vmem [thread:$0]  %s2, 2048, %s48, [#allocation7], 128, 128, 8
    $region13: #{tpu_custom_call.1} parent=1 // pred_fallthru
      _
    // Predicated region
    $region14: #{tpu_custom_call.1} parent=1 // pred_check
      _
    $region15: #{tpu_custom_call.1} parent=1 // pred_check_branch
      %55 = sbr.rel (0) target = $region17
    $region16: #{tpu_custom_call.1} parent=1 // pred_region
      _
    $region17: #{tpu_custom_call.1} parent=1 // pred_fallthru
      _
    // Predicated region
    $region18: #{tpu_custom_call.1} parent=1 // pred_check
      _
    $region19: #{tpu_custom_call.1} parent=1 // pred_check_branch
      %57 = sbr.rel (0) target = $region21
    $region20: #{tpu_custom_call.1} parent=1 // pred_region
      %s59 = ssub.s32 4096, 4096
      %60 = vsyncadd [#allocation10], %s59
      %s61 = sshll.u32 [#allocation9], 4
      %s62 = int_to_ptr.vmem [resolvable:$true] %s61
      %67 = dma.hbm_to_vmem [thread:$0]  %s4, 4096, %s62, [#allocation10], 128, 128, 8
    $region21: #{tpu_custom_call.1} parent=1 // pred_fallthru
      _
    // Predicated region
    $region22: #{tpu_custom_call.1} parent=1 // pred_check
      _
    $region23: #{tpu_custom_call.1} parent=1 // pred_check_branch
      %69 = sbr.rel (0) target = $region25
    $region24: #{tpu_custom_call.1} parent=1 // pred_region
      _
    $region25: #{tpu_custom_call.1} parent=1 // pred_fallthru
      _
    // Predicated region
    $region26: #{tpu_custom_call.1} parent=1 // pred_check
      _
    $region27: #{tpu_custom_call.1} parent=1 // pred_check_branch
      %71 = sbr.rel (0) target = $region29
    $region28: #{tpu_custom_call.1} parent=1 // pred_region
      %s73 = ssub.s32 8192, 8192
      %74 = vsyncadd [#allocation10], %s73
      %s75 = sshll.u32 [#allocation11], 4
      %s76 = int_to_ptr.vmem [resolvable:$true] %s75
      %81 = dma.hbm_to_vmem [thread:$0]  %s6, 8192, %s76, [#allocation10], 128, 128, 8
    $region29: #{tpu_custom_call.1} parent=1 // pred_fallthru
      _
    // Predicated region
    $region30: #{tpu_custom_call.1} parent=1 // pred_check
      _
    $region31: #{tpu_custom_call.1} parent=1 // pred_check_branch
      %83 = sbr.rel (0) target = $region33
    $region32: #{tpu_custom_call.1} parent=1 // pred_region
      _
    $region33: #{tpu_custom_call.1} parent=1 // pred_fallthru
      _
    // Predicated region
    $region34: #{tpu_custom_call.1} parent=1 // pred_check
      _
    $region35: #{tpu_custom_call.1} parent=1 // pred_check_branch
      %85 = sbr.rel (0) target = $region37
    $region36: #{tpu_custom_call.1} parent=1 // pred_region
      %s87 = ssub.s32 10240, 10240
      %88 = vsyncadd [#allocation13], %s87
      %s89 = sshll.u32 [#allocation12], 4
      %s90 = int_to_ptr.vmem [resolvable:$true] %s89
      %95 = dma.hbm_to_vmem [thread:$0]  %s8, 10240, %s90, [#allocation13], 128, 128, 8
    $region37: #{tpu_custom_call.1} parent=1 // pred_fallthru
      _
    // Predicated region
    $region38: #{tpu_custom_call.1} parent=1 // pred_check
      _
    $region39: #{tpu_custom_call.1} parent=1 // pred_check_branch
      %97 = sbr.rel (0) target = $region41
    $region40: #{tpu_custom_call.1} parent=1 // pred_region
      _
    $region41: #{tpu_custom_call.1} parent=1 // pred_fallthru
      _
    // Predicated region
    $region42: #{tpu_custom_call.1} parent=1 // pred_check
      _
    $region43: #{tpu_custom_call.1} parent=1 // pred_check_branch
      %99 = sbr.rel (0) target = $region45
    $region44: #{tpu_custom_call.1} parent=1 // pred_region
      %s101 = ssub.s32 12288, 12288
      %102 = vsyncadd [#allocation13], %s101
      %s103 = sshll.u32 [#allocation14], 4
      %s104 = int_to_ptr.vmem [resolvable:$true] %s103
      %109 = dma.hbm_to_vmem [thread:$0]  %s10, 12288, %s104, [#allocation13], 128, 128, 8
    $region45: #{tpu_custom_call.1} parent=1 // pred_fallthru
      _
    // Predicated region
    $region46: #{tpu_custom_call.1} parent=1 // pred_check
      _
    $region47: #{tpu_custom_call.1} parent=1 // pred_check_branch
      %111 = sbr.rel (0) target = $region49
    $region48: #{tpu_custom_call.1} parent=1 // pred_region
      _
    $region49: #{tpu_custom_call.1} parent=1 // pred_fallthru
      _
    // Predicated region
    $region50: #{tpu_custom_call.1} parent=1 // pred_check
      _
    $region51: #{tpu_custom_call.1} parent=1 // pred_check_branch
      %113 = sbr.rel (0) target = $region53
    $region52: #{tpu_custom_call.1} parent=1 // pred_region
      %114 = dma.done [#allocation4], 128
    $region53: #{tpu_custom_call.1} parent=1 // pred_fallthru
      _
    // Predicated region
    $region54: #{tpu_custom_call.1} parent=1 // pred_check
      _
    $region55: #{tpu_custom_call.1} parent=1 // pred_check_branch
      %116 = sbr.rel (0) target = $region57
    $region56: #{tpu_custom_call.1} parent=1 // pred_region
      %117 = dma.done [#allocation7], 128
    $region57: #{tpu_custom_call.1} parent=1 // pred_fallthru
      _
    // Predicated region
    $region58: #{tpu_custom_call.1} parent=1 // pred_check
      _
    $region59: #{tpu_custom_call.1} parent=1 // pred_check_branch
      %119 = sbr.rel (0) target = $region61
    $region60: #{tpu_custom_call.1} parent=1 // pred_region
      %120 = dma.done [#allocation7], 2048
    $region61: #{tpu_custom_call.1} parent=1 // pred_fallthru
      _
    // Predicated region
    $region62: #{tpu_custom_call.1} parent=1 // pred_check
      _
    $region63: #{tpu_custom_call.1} parent=1 // pred_check_branch
      %122 = sbr.rel (0) target = $region65
    $region64: #{tpu_custom_call.1} parent=1 // pred_region
      %123 = dma.done [#allocation10], 4096
    $region65: #{tpu_custom_call.1} parent=1 // pred_fallthru
      _
    // Predicated region
    $region66: #{tpu_custom_call.1} parent=1 // pred_check
      _
    $region67: #{tpu_custom_call.1} parent=1 // pred_check_branch
      %125 = sbr.rel (0) target = $region69
    $region68: #{tpu_custom_call.1} parent=1 // pred_region
      %126 = dma.done [#allocation10], 8192
    $region69: #{tpu_custom_call.1} parent=1 // pred_fallthru
      _
    // Predicated region
    $region70: #{tpu_custom_call.1} parent=1 // pred_check
      _
    $region71: #{tpu_custom_call.1} parent=1 // pred_check_branch
      %128 = sbr.rel (0) target = $region73
    $region72: #{tpu_custom_call.1} parent=1 // pred_region
      %129 = dma.done [#allocation13], 10240
    $region73: #{tpu_custom_call.1} parent=1 // pred_fallthru
      _
    // Predicated region
    $region74: #{tpu_custom_call.1} parent=1 // pred_check
      _
    $region75: #{tpu_custom_call.1} parent=1 // pred_check_branch
      %131 = sbr.rel (0) target = $region77
    $region76: #{tpu_custom_call.1} parent=1 // pred_region
      %132 = dma.done [#allocation13], 12288
    $region77: #{tpu_custom_call.1} parent=1 // pred_fallthru
      _
    %v133 = vld [vmem:[#allocation3] sm:$0xff]
    %134 = vst [vmem:[#allocation2] sm:$0xff] %v133
    %v135 = vld [vmem:[#allocation2] sm:$0xff]
    %v136 = vld [vmem:[#allocation8] sm:$0xff]
    %v137 = vld [vmem:[#allocation8 + $0x8] sm:$0xff]
    %v138 = vld [vmem:[#allocation8 + $0x10] sm:$0xff]
    %v139 = vld [vmem:[#allocation8 + $0x18] sm:$0xff]
    %v140 = vld [vmem:[#allocation8 + $0x20] sm:$0xff]
    %v141 = vld [vmem:[#allocation8 + $0x28] sm:$0xff]
    %v142 = vld [vmem:[#allocation8 + $0x30] sm:$0xff]
    %v143 = vld [vmem:[#allocation8 + $0x38] sm:$0xff]
    %v144 = vld [vmem:[#allocation8 + $0x40] sm:$0xff]
    %v145 = vld [vmem:[#allocation8 + $0x48] sm:$0xff]
    %v146 = vld [vmem:[#allocation8 + $0x50] sm:$0xff]
    %v147 = vld [vmem:[#allocation8 + $0x58] sm:$0xff]
    %v148 = vld [vmem:[#allocation8 + $0x60] sm:$0xff]
    %v149 = vld [vmem:[#allocation8 + $0x68] sm:$0xff]
    %v150 = vld [vmem:[#allocation8 + $0x70] sm:$0xff]
    %v151 = vld [vmem:[#allocation8 + $0x78] sm:$0xff]
    %v152 = vld [vmem:[%s3] sm:$0x1]
    %v154 = vlaneseq
    %v155 = vshrl.u32 %v154, 7
    %v156 = vsub.s32 0, %v155
    %v157 = vrot.slane %v152, %v156
    %159 = vmatprep.subr.mxu0 0.0
    %160 = vmatpush1.msra.mxu0 %v136
    %161 = vmatprep.subr.mxu0 0.0
    %162 = vmatpush1.msra.mxu0 %v137
    %163 = vmatprep.subr.mxu0 0.0
    %164 = vmatpush1.msra.mxu0 %v138
    %165 = vmatprep.subr.mxu0 0.0
    %166 = vmatpush1.msra.mxu0 %v139
    %167 = vmatprep.subr.mxu0 0.0
    %168 = vmatpush1.msra.mxu0 %v140
    %169 = vmatprep.subr.mxu0 0.0
    %170 = vmatpush1.msra.mxu0 %v141
    %171 = vmatprep.subr.mxu0 0.0
    %172 = vmatpush1.msra.mxu0 %v142
    %173 = vmatprep.subr.mxu0 0.0
    %174 = vmatpush1.msra.mxu0 %v143
    %175 = vmatprep.subr.mxu0 0.0
    %176 = vmatpush1.msra.mxu0 %v144
    %177 = vmatprep.subr.mxu0 0.0
    %178 = vmatpush1.msra.mxu0 %v145
    %179 = vmatprep.subr.mxu0 0.0
    %180 = vmatpush1.msra.mxu0 %v146
    %181 = vmatprep.subr.mxu0 0.0
    %182 = vmatpush1.msra.mxu0 %v147
    %183 = vmatprep.subr.mxu0 0.0
    %184 = vmatpush1.msra.mxu0 %v148
    %185 = vmatprep.subr.mxu0 0.0
    %186 = vmatpush1.msra.mxu0 %v149
    %187 = vmatprep.subr.mxu0 0.0
    %188 = vmatpush1.msra.mxu0 %v150
    %189 = vmatprep.subr.mxu0 0.0
    %190 = vmatpush1.msra.mxu0 %v151
    %191 = vmatprep.subr.mxu0 0.0
    %192 = vmatpush1.msra.mxu0 0.0
    %193 = vmatprep.subr.mxu0 0.0
    %194 = vmatpush1.msra.mxu0 0.0
    %195 = vmatprep.subr.mxu0 0.0
    %196 = vmatpush1.msra.mxu0 0.0
    %197 = vmatprep.subr.mxu0 0.0
    %198 = vmatpush1.msra.mxu0 0.0
    %199 = vmatprep.subr.mxu0 0.0
    %200 = vmatpush1.msra.mxu0 0.0
    %201 = vmatprep.subr.mxu0 0.0
    %202 = vmatpush1.msra.mxu0 0.0
    %203 = vmatprep.subr.mxu0 0.0
    %204 = vmatpush1.msra.mxu0 0.0
    %205 = vmatprep.subr.mxu0 0.0
    %206 = vmatpush1.msra.mxu0 0.0
    %207 = vmatprep.subr.mxu0 0.0
    %208 = vmatpush1.msra.mxu0 0.0
    %209 = vmatprep.subr.mxu0 0.0
    %210 = vmatpush1.msra.mxu0 0.0
    %211 = vmatprep.subr.mxu0 0.0
    %212 = vmatpush1.msra.mxu0 0.0
    %213 = vmatprep.subr.mxu0 0.0
    %214 = vmatpush1.msra.mxu0 0.0
    %215 = vmatprep.subr.mxu0 0.0
    %216 = vmatpush1.msra.mxu0 0.0
    %217 = vmatprep.subr.mxu0 0.0
    %218 = vmatpush1.msra.mxu0 0.0
    %219 = vmatprep.subr.mxu0 0.0
    %220 = vmatpush1.msra.mxu0 0.0
    %221 = vmatprep.subr.mxu0 0.0
    %222 = vmatpush1.msra.mxu0 0.0
    %223 = vmatprep.mubr.f32.mxu0 0.0
    %224 = vmatmul.mubr.f32.gmra.mrb[0].mxu0 %v135
    %v225 = vpop.f32.mrb[0].mxu0
    %v226 = vadd.f32 %v157, %v225
    %v227 = vpop.f32.mrb[0].mxu0
    %228 = vdwg.mxu0
    %v229 = vxor.u32 %v226, 2147483648
    %v230 = vmul.f32 %v229, 1.442695
    %v231 = vpow.pop %v230
    %v232 = vadd.f32 %v231, 1.0
    %v233 = vrcp.pop %v232
    %v234 = vmul.f32 1.0, %v233
    %v235 = vmul.f32 %v226, %v234
    %236 = vst [vmem:[#allocation2 + $0x8] sm:$0xff] %v235
    %v237 = vld [vmem:[#allocation2] sm:$0xff]
    %v238 = vld [vmem:[#allocation2 + $0x8] sm:$0xff]
    %v239 = vld [vmem:[#allocation9] sm:$0xff]
    %v240 = vld [vmem:[#allocation9 + $0x8] sm:$0xff]
    %v241 = vld [vmem:[#allocation9 + $0x10] sm:$0xff]
    %v242 = vld [vmem:[#allocation9 + $0x18] sm:$0xff]
    %v243 = vld [vmem:[#allocation9 + $0x20] sm:$0xff]
    %v244 = vld [vmem:[#allocation9 + $0x28] sm:$0xff]
    %v245 = vld [vmem:[#allocation9 + $0x30] sm:$0xff]
    %v246 = vld [vmem:[#allocation9 + $0x38] sm:$0xff]
    %v247 = vld [vmem:[#allocation9 + $0x40] sm:$0xff]
    %v248 = vld [vmem:[#allocation9 + $0x48] sm:$0xff]
    %v249 = vld [vmem:[#allocation9 + $0x50] sm:$0xff]
    %v250 = vld [vmem:[#allocation9 + $0x58] sm:$0xff]
    %v251 = vld [vmem:[#allocation9 + $0x60] sm:$0xff]
    %v252 = vld [vmem:[#allocation9 + $0x68] sm:$0xff]
    %v253 = vld [vmem:[#allocation9 + $0x70] sm:$0xff]
    %v254 = vld [vmem:[#allocation9 + $0x78] sm:$0xff]
    %v255 = vld [vmem:[#allocation9 + $0x80] sm:$0xff]
    %v256 = vld [vmem:[#allocation9 + $0x88] sm:$0xff]
    %v257 = vld [vmem:[#allocation9 + $0x90] sm:$0xff]
    %v258 = vld [vmem:[#allocation9 + $0x98] sm:$0xff]
    %v259 = vld [vmem:[#allocation9 + $0xa0] sm:$0xff]
    %v260 = vld [vmem:[#allocation9 + $0xa8] sm:$0xff]
    %v261 = vld [vmem:[#allocation9 + $0xb0] sm:$0xff]
    %v262 = vld [vmem:[#allocation9 + $0xb8] sm:$0xff]
    %v263 = vld [vmem:[#allocation9 + $0xc0] sm:$0xff]
    %v264 = vld [vmem:[#allocation9 + $0xc8] sm:$0xff]
    %v265 = vld [vmem:[#allocation9 + $0xd0] sm:$0xff]
    %v266 = vld [vmem:[#allocation9 + $0xd8] sm:$0xff]
    %v267 = vld [vmem:[#allocation9 + $0xe0] sm:$0xff]
    %v268 = vld [vmem:[#allocation9 + $0xe8] sm:$0xff]
    %v269 = vld [vmem:[#allocation9 + $0xf0] sm:$0xff]
    %v270 = vld [vmem:[#allocation9 + $0xf8] sm:$0xff]
    %v271 = vld [vmem:[%s5] sm:$0x1]
    %v273 = vlaneseq
    %v274 = vshrl.u32 %v273, 7
    %v275 = vsub.s32 0, %v274
    %v276 = vrot.slane %v271, %v275
    %278 = vmatprep.subr.mxu0 0.0
    %279 = vmatpush1.msra.mxu0 %v239
    %280 = vmatprep.subr.mxu0 0.0
    %281 = vmatpush1.msra.mxu0 %v240
    %282 = vmatprep.subr.mxu0 0.0
    %283 = vmatpush1.msra.mxu0 %v241
    %284 = vmatprep.subr.mxu0 0.0
    %285 = vmatpush1.msra.mxu0 %v242
    %286 = vmatprep.subr.mxu0 0.0
    %287 = vmatpush1.msra.mxu0 %v243
    %288 = vmatprep.subr.mxu0 0.0
    %289 = vmatpush1.msra.mxu0 %v244
    %290 = vmatprep.subr.mxu0 0.0
    %291 = vmatpush1.msra.mxu0 %v245
    %292 = vmatprep.subr.mxu0 0.0
    %293 = vmatpush1.msra.mxu0 %v246
    %294 = vmatprep.subr.mxu0 0.0
    %295 = vmatpush1.msra.mxu0 %v247
    %296 = vmatprep.subr.mxu0 0.0
    %297 = vmatpush1.msra.mxu0 %v248
    %298 = vmatprep.subr.mxu0 0.0
    %299 = vmatpush1.msra.mxu0 %v249
    %300 = vmatprep.subr.mxu0 0.0
    %301 = vmatpush1.msra.mxu0 %v250
    %302 = vmatprep.subr.mxu0 0.0
    %303 = vmatpush1.msra.mxu0 %v251
    %304 = vmatprep.subr.mxu0 0.0
    %305 = vmatpush1.msra.mxu0 %v252
    %306 = vmatprep.subr.mxu0 0.0
    %307 = vmatpush1.msra.mxu0 %v253
    %308 = vmatprep.subr.mxu0 0.0
    %309 = vmatpush1.msra.mxu0 %v254
    %310 = vmatprep.subr.mxu0 0.0
    %311 = vmatpush1.msra.mxu0 %v255
    %312 = vmatprep.subr.mxu0 0.0
    %313 = vmatpush1.msra.mxu0 %v256
    %314 = vmatprep.subr.mxu0 0.0
    %315 = vmatpush1.msra.mxu0 %v257
    %316 = vmatprep.subr.mxu0 0.0
    %317 = vmatpush1.msra.mxu0 %v258
    %318 = vmatprep.subr.mxu0 0.0
    %319 = vmatpush1.msra.mxu0 %v259
    %320 = vmatprep.subr.mxu0 0.0
    %321 = vmatpush1.msra.mxu0 %v260
    %322 = vmatprep.subr.mxu0 0.0
    %323 = vmatpush1.msra.mxu0 %v261
    %324 = vmatprep.subr.mxu0 0.0
    %325 = vmatpush1.msra.mxu0 %v262
    %326 = vmatprep.subr.mxu0 0.0
    %327 = vmatpush1.msra.mxu0 %v263
    %328 = vmatprep.subr.mxu0 0.0
    %329 = vmatpush1.msra.mxu0 %v264
    %330 = vmatprep.subr.mxu0 0.0
    %331 = vmatpush1.msra.mxu0 %v265
    %332 = vmatprep.subr.mxu0 0.0
    %333 = vmatpush1.msra.mxu0 %v266
    %334 = vmatprep.subr.mxu0 0.0
    %335 = vmatpush1.msra.mxu0 %v267
    %336 = vmatprep.subr.mxu0 0.0
    %337 = vmatpush1.msra.mxu0 %v268
    %338 = vmatprep.subr.mxu0 0.0
    %339 = vmatpush1.msra.mxu0 %v269
    %340 = vmatprep.subr.mxu0 0.0
    %341 = vmatpush1.msra.mxu0 %v270
    %342 = vmatprep.mubr.f32.mxu0 %v238
    %343 = vmatmul.mubr.f32.gmra.mrb[0].mxu0 %v237
    %v344 = vpop.f32.mrb[0].mxu0
    %v345 = vadd.f32 %v276, %v344
    %v346 = vpop.f32.mrb[0].mxu0
    %347 = vdwg.mxu0
    %v348 = vxor.u32 %v345, 2147483648
    %v349 = vmul.f32 %v348, 1.442695
    %v350 = vpow.pop %v349
    %v351 = vadd.f32 %v350, 1.0
    %v352 = vrcp.pop %v351
    %v353 = vmul.f32 1.0, %v352
    %v354 = vmul.f32 %v345, %v353
    %355 = vst [vmem:[#allocation2 + $0x10] sm:$0xff] %v354
    %v356 = vld [vmem:[#allocation6] sm:$0xff]
    %357 = vst [vmem:[#allocation2 + $0x18] sm:$0xff] %v356
    %v358 = vld [vmem:[#allocation2] sm:$0xff]
    %v359 = vld [vmem:[#allocation2 + $0x8] sm:$0xff]
    %v360 = vld [vmem:[#allocation2 + $0x10] sm:$0xff]
    %v361 = vld [vmem:[#allocation2 + $0x18] sm:$0xff]
    %v362 = vld [vmem:[#allocation11] sm:$0xff]
    %v363 = vld [vmem:[#allocation11 + $0x8] sm:$0xff]
    %v364 = vld [vmem:[#allocation11 + $0x10] sm:$0xff]
    %v365 = vld [vmem:[#allocation11 + $0x18] sm:$0xff]
    %v366 = vld [vmem:[#allocation11 + $0x20] sm:$0xff]
    %v367 = vld [vmem:[#allocation11 + $0x28] sm:$0xff]
    %v368 = vld [vmem:[#allocation11 + $0x30] sm:$0xff]
    %v369 = vld [vmem:[#allocation11 + $0x38] sm:$0xff]
    %v370 = vld [vmem:[#allocation11 + $0x40] sm:$0xff]
    %v371 = vld [vmem:[#allocation11 + $0x48] sm:$0xff]
    %v372 = vld [vmem:[#allocation11 + $0x50] sm:$0xff]
    %v373 = vld [vmem:[#allocation11 + $0x58] sm:$0xff]
    %v374 = vld [vmem:[#allocation11 + $0x60] sm:$0xff]
    %v375 = vld [vmem:[#allocation11 + $0x68] sm:$0xff]
    %v376 = vld [vmem:[#allocation11 + $0x70] sm:$0xff]
    %v377 = vld [vmem:[#allocation11 + $0x78] sm:$0xff]
    %v378 = vld [vmem:[#allocation11 + $0x80] sm:$0xff]
    %v379 = vld [vmem:[#allocation11 + $0x88] sm:$0xff]
    %v380 = vld [vmem:[#allocation11 + $0x90] sm:$0xff]
    %v381 = vld [vmem:[#allocation11 + $0x98] sm:$0xff]
    %v382 = vld [vmem:[#allocation11 + $0xa0] sm:$0xff]
    %v383 = vld [vmem:[#allocation11 + $0xa8] sm:$0xff]
    %v384 = vld [vmem:[#allocation11 + $0xb0] sm:$0xff]
    %v385 = vld [vmem:[#allocation11 + $0xb8] sm:$0xff]
    %v386 = vld [vmem:[#allocation11 + $0xc0] sm:$0xff]
    %v387 = vld [vmem:[#allocation11 + $0xc8] sm:$0xff]
    %v388 = vld [vmem:[#allocation11 + $0xd0] sm:$0xff]
    %v389 = vld [vmem:[#allocation11 + $0xd8] sm:$0xff]
    %v390 = vld [vmem:[#allocation11 + $0xe0] sm:$0xff]
    %v391 = vld [vmem:[#allocation11 + $0xe8] sm:$0xff]
    %v392 = vld [vmem:[#allocation11 + $0xf0] sm:$0xff]
    %v393 = vld [vmem:[#allocation11 + $0xf8] sm:$0xff]
    %v394 = vld [vmem:[#allocation11 + $0x100] sm:$0xff]
    %v395 = vld [vmem:[#allocation11 + $0x108] sm:$0xff]
    %v396 = vld [vmem:[#allocation11 + $0x110] sm:$0xff]
    %v397 = vld [vmem:[#allocation11 + $0x118] sm:$0xff]
    %v398 = vld [vmem:[#allocation11 + $0x120] sm:$0xff]
    %v399 = vld [vmem:[#allocation11 + $0x128] sm:$0xff]
    %v400 = vld [vmem:[#allocation11 + $0x130] sm:$0xff]
    %v401 = vld [vmem:[#allocation11 + $0x138] sm:$0xff]
    %v402 = vld [vmem:[#allocation11 + $0x140] sm:$0xff]
    %v403 = vld [vmem:[#allocation11 + $0x148] sm:$0xff]
    %v404 = vld [vmem:[#allocation11 + $0x150] sm:$0xff]
    %v405 = vld [vmem:[#allocation11 + $0x158] sm:$0xff]
    %v406 = vld [vmem:[#allocation11 + $0x160] sm:$0xff]
    %v407 = vld [vmem:[#allocation11 + $0x168] sm:$0xff]
    %v408 = vld [vmem:[#allocation11 + $0x170] sm:$0xff]
    %v409 = vld [vmem:[#allocation11 + $0x178] sm:$0xff]
    %v410 = vld [vmem:[#allocation11 + $0x180] sm:$0xff]
    %v411 = vld [vmem:[#allocation11 + $0x188] sm:$0xff]
    %v412 = vld [vmem:[#allocation11 + $0x190] sm:$0xff]
    %v413 = vld [vmem:[#allocation11 + $0x198] sm:$0xff]
    %v414 = vld [vmem:[#allocation11 + $0x1a0] sm:$0xff]
    %v415 = vld [vmem:[#allocation11 + $0x1a8] sm:$0xff]
    %v416 = vld [vmem:[#allocation11 + $0x1b0] sm:$0xff]
    %v417 = vld [vmem:[#allocation11 + $0x1b8] sm:$0xff]
    %v418 = vld [vmem:[#allocation11 + $0x1c0] sm:$0xff]
    %v419 = vld [vmem:[#allocation11 + $0x1c8] sm:$0xff]
    %v420 = vld [vmem:[#allocation11 + $0x1d0] sm:$0xff]
    %v421 = vld [vmem:[#allocation11 + $0x1d8] sm:$0xff]
    %v422 = vld [vmem:[#allocation11 + $0x1e0] sm:$0xff]
    %v423 = vld [vmem:[#allocation11 + $0x1e8] sm:$0xff]
    %v424 = vld [vmem:[#allocation11 + $0x1f0] sm:$0xff]
    %v425 = vld [vmem:[#allocation11 + $0x1f8] sm:$0xff]
    %v426 = vld [vmem:[%s7] sm:$0x1]
    %v428 = vlaneseq
    %v429 = vshrl.u32 %v428, 7
    %v430 = vsub.s32 0, %v429
    %v431 = vrot.slane %v426, %v430
    %433 = vmatprep.subr.mxu0 0.0
    %434 = vmatpush1.msra.mxu0 %v362
    %435 = vmatprep.subr.mxu0 0.0
    %436 = vmatpush1.msra.mxu0 %v363
    %437 = vmatprep.subr.mxu0 0.0
    %438 = vmatpush1.msra.mxu0 %v364
    %439 = vmatprep.subr.mxu0 0.0
    %440 = vmatpush1.msra.mxu0 %v365
    %441 = vmatprep.subr.mxu0 0.0
    %442 = vmatpush1.msra.mxu0 %v366
    %443 = vmatprep.subr.mxu0 0.0
    %444 = vmatpush1.msra.mxu0 %v367
    %445 = vmatprep.subr.mxu0 0.0
    %446 = vmatpush1.msra.mxu0 %v368
    %447 = vmatprep.subr.mxu0 0.0
    %448 = vmatpush1.msra.mxu0 %v369
    %449 = vmatprep.subr.mxu0 0.0
    %450 = vmatpush1.msra.mxu0 %v370
    %451 = vmatprep.subr.mxu0 0.0
    %452 = vmatpush1.msra.mxu0 %v371
    %453 = vmatprep.subr.mxu0 0.0
    %454 = vmatpush1.msra.mxu0 %v372
    %455 = vmatprep.subr.mxu0 0.0
    %456 = vmatpush1.msra.mxu0 %v373
    %457 = vmatprep.subr.mxu0 0.0
    %458 = vmatpush1.msra.mxu0 %v374
    %459 = vmatprep.subr.mxu0 0.0
    %460 = vmatpush1.msra.mxu0 %v375
    %461 = vmatprep.subr.mxu0 0.0
    %462 = vmatpush1.msra.mxu0 %v376
    %463 = vmatprep.subr.mxu0 0.0
    %464 = vmatpush1.msra.mxu0 %v377
    %465 = vmatprep.subr.mxu0 0.0
    %466 = vmatpush1.msra.mxu0 %v378
    %467 = vmatprep.subr.mxu0 0.0
    %468 = vmatpush1.msra.mxu0 %v379
    %469 = vmatprep.subr.mxu0 0.0
    %470 = vmatpush1.msra.mxu0 %v380
    %471 = vmatprep.subr.mxu0 0.0
    %472 = vmatpush1.msra.mxu0 %v381
    %473 = vmatprep.subr.mxu0 0.0
    %474 = vmatpush1.msra.mxu0 %v382
    %475 = vmatprep.subr.mxu0 0.0
    %476 = vmatpush1.msra.mxu0 %v383
    %477 = vmatprep.subr.mxu0 0.0
    %478 = vmatpush1.msra.mxu0 %v384
    %479 = vmatprep.subr.mxu0 0.0
    %480 = vmatpush1.msra.mxu0 %v385
    %481 = vmatprep.subr.mxu0 0.0
    %482 = vmatpush1.msra.mxu0 %v386
    %483 = vmatprep.subr.mxu0 0.0
    %484 = vmatpush1.msra.mxu0 %v387
    %485 = vmatprep.subr.mxu0 0.0
    %486 = vmatpush1.msra.mxu0 %v388
    %487 = vmatprep.subr.mxu0 0.0
    %488 = vmatpush1.msra.mxu0 %v389
    %489 = vmatprep.subr.mxu0 0.0
    %490 = vmatpush1.msra.mxu0 %v390
    %491 = vmatprep.subr.mxu0 0.0
    %492 = vmatpush1.msra.mxu0 %v391
    %493 = vmatprep.subr.mxu0 0.0
    %494 = vmatpush1.msra.mxu0 %v392
    %495 = vmatprep.subr.mxu0 0.0
    %496 = vmatpush1.msra.mxu0 %v393
    %497 = vmatprep.mubr.f32.mxu0 %v359
    %498 = vmatmul.mubr.f32.gmra.mrb[0].mxu0 %v358
    %v499 = vpop.f32.mrb[0].mxu0
    %v500 = vadd.f32 %v431, %v499
    %v501 = vpop.f32.mrb[0].mxu0
    %502 = vdwg.mxu0
    %503 = vmatprep.subr.mxu0 0.0
    %504 = vmatpush1.msra.mxu0 %v394
    %505 = vmatprep.subr.mxu0 0.0
    %506 = vmatpush1.msra.mxu0 %v395
    %507 = vmatprep.subr.mxu0 0.0
    %508 = vmatpush1.msra.mxu0 %v396
    %509 = vmatprep.subr.mxu0 0.0
    %510 = vmatpush1.msra.mxu0 %v397
    %511 = vmatprep.subr.mxu0 0.0
    %512 = vmatpush1.msra.mxu0 %v398
    %513 = vmatprep.subr.mxu0 0.0
    %514 = vmatpush1.msra.mxu0 %v399
    %515 = vmatprep.subr.mxu0 0.0
    %516 = vmatpush1.msra.mxu0 %v400
    %517 = vmatprep.subr.mxu0 0.0
    %518 = vmatpush1.msra.mxu0 %v401
    %519 = vmatprep.subr.mxu0 0.0
    %520 = vmatpush1.msra.mxu0 %v402
    %521 = vmatprep.subr.mxu0 0.0
    %522 = vmatpush1.msra.mxu0 %v403
    %523 = vmatprep.subr.mxu0 0.0
    %524 = vmatpush1.msra.mxu0 %v404
    %525 = vmatprep.subr.mxu0 0.0
    %526 = vmatpush1.msra.mxu0 %v405
    %527 = vmatprep.subr.mxu0 0.0
    %528 = vmatpush1.msra.mxu0 %v406
    %529 = vmatprep.subr.mxu0 0.0
    %530 = vmatpush1.msra.mxu0 %v407
    %531 = vmatprep.subr.mxu0 0.0
    %532 = vmatpush1.msra.mxu0 %v408
    %533 = vmatprep.subr.mxu0 0.0
    %534 = vmatpush1.msra.mxu0 %v409
    %535 = vmatprep.subr.mxu0 0.0
    %536 = vmatpush1.msra.mxu0 %v410
    %537 = vmatprep.subr.mxu0 0.0
    %538 = vmatpush1.msra.mxu0 %v411
    %539 = vmatprep.subr.mxu0 0.0
    %540 = vmatpush1.msra.mxu0 %v412
    %541 = vmatprep.subr.mxu0 0.0
    %542 = vmatpush1.msra.mxu0 %v413
    %543 = vmatprep.subr.mxu0 0.0
    %544 = vmatpush1.msra.mxu0 %v414
    %545 = vmatprep.subr.mxu0 0.0
    %546 = vmatpush1.msra.mxu0 %v415
    %547 = vmatprep.subr.mxu0 0.0
    %548 = vmatpush1.msra.mxu0 %v416
    %549 = vmatprep.subr.mxu0 0.0
    %550 = vmatpush1.msra.mxu0 %v417
    %551 = vmatprep.subr.mxu0 0.0
    %552 = vmatpush1.msra.mxu0 %v418
    %553 = vmatprep.subr.mxu0 0.0
    %554 = vmatpush1.msra.mxu0 %v419
    %555 = vmatprep.subr.mxu0 0.0
    %556 = vmatpush1.msra.mxu0 %v420
    %557 = vmatprep.subr.mxu0 0.0
    %558 = vmatpush1.msra.mxu0 %v421
    %559 = vmatprep.subr.mxu0 0.0
    %560 = vmatpush1.msra.mxu0 %v422
    %561 = vmatprep.subr.mxu0 0.0
    %562 = vmatpush1.msra.mxu0 %v423
    %563 = vmatprep.subr.mxu0 0.0
    %564 = vmatpush1.msra.mxu0 %v424
    %565 = vmatprep.subr.mxu0 0.0
    %566 = vmatpush1.msra.mxu0 %v425
    %567 = vmatprep.mubr.f32.mxu0 %v361
    %568 = vmatmul.mubr.f32.gmra.mrb[0].mxu0 %v360
    %v569 = vpop.f32.mrb[0].mxu0
    %v570 = vadd.f32 %v500, %v569
    %v571 = vpop.f32.mrb[0].mxu0
    %572 = vdwg.mxu0
    %v573 = vxor.u32 %v570, 2147483648
    %v574 = vmul.f32 %v573, 1.442695
    %v575 = vpow.pop %v574
    %v576 = vadd.f32 %v575, 1.0
    %v577 = vrcp.pop %v576
    %v578 = vmul.f32 1.0, %v577
    %v579 = vmul.f32 %v570, %v578
    %580 = vst [vmem:[#allocation2 + $0x20] sm:$0xff] %v579
    %v581 = vld [vmem:[#allocation2] sm:$0xff]
    %v582 = vld [vmem:[#allocation2 + $0x8] sm:$0xff]
    %v583 = vld [vmem:[#allocation2 + $0x10] sm:$0xff]
    %v584 = vld [vmem:[#allocation2 + $0x18] sm:$0xff]
    %v585 = vld [vmem:[#allocation2 + $0x20] sm:$0xff]
    %v586 = vld [vmem:[#allocation12] sm:$0xff]
    %v587 = vld [vmem:[#allocation12 + $0x8] sm:$0xff]
    %v588 = vld [vmem:[#allocation12 + $0x10] sm:$0xff]
    %v589 = vld [vmem:[#allocation12 + $0x18] sm:$0xff]
    %v590 = vld [vmem:[#allocation12 + $0x20] sm:$0xff]
    %v591 = vld [vmem:[#allocation12 + $0x28] sm:$0xff]
    %v592 = vld [vmem:[#allocation12 + $0x30] sm:$0xff]
    %v593 = vld [vmem:[#allocation12 + $0x38] sm:$0xff]
    %v594 = vld [vmem:[#allocation12 + $0x40] sm:$0xff]
    %v595 = vld [vmem:[#allocation12 + $0x48] sm:$0xff]
    %v596 = vld [vmem:[#allocation12 + $0x50] sm:$0xff]
    %v597 = vld [vmem:[#allocation12 + $0x58] sm:$0xff]
    %v598 = vld [vmem:[#allocation12 + $0x60] sm:$0xff]
    %v599 = vld [vmem:[#allocation12 + $0x68] sm:$0xff]
    %v600 = vld [vmem:[#allocation12 + $0x70] sm:$0xff]
    %v601 = vld [vmem:[#allocation12 + $0x78] sm:$0xff]
    %v602 = vld [vmem:[#allocation12 + $0x80] sm:$0xff]
    %v603 = vld [vmem:[#allocation12 + $0x88] sm:$0xff]
    %v604 = vld [vmem:[#allocation12 + $0x90] sm:$0xff]
    %v605 = vld [vmem:[#allocation12 + $0x98] sm:$0xff]
    %v606 = vld [vmem:[#allocation12 + $0xa0] sm:$0xff]
    %v607 = vld [vmem:[#allocation12 + $0xa8] sm:$0xff]
    %v608 = vld [vmem:[#allocation12 + $0xb0] sm:$0xff]
    %v609 = vld [vmem:[#allocation12 + $0xb8] sm:$0xff]
    %v610 = vld [vmem:[#allocation12 + $0xc0] sm:$0xff]
    %v611 = vld [vmem:[#allocation12 + $0xc8] sm:$0xff]
    %v612 = vld [vmem:[#allocation12 + $0xd0] sm:$0xff]
    %v613 = vld [vmem:[#allocation12 + $0xd8] sm:$0xff]
    %v614 = vld [vmem:[#allocation12 + $0xe0] sm:$0xff]
    %v615 = vld [vmem:[#allocation12 + $0xe8] sm:$0xff]
    %v616 = vld [vmem:[#allocation12 + $0xf0] sm:$0xff]
    %v617 = vld [vmem:[#allocation12 + $0xf8] sm:$0xff]
    %v618 = vld [vmem:[#allocation12 + $0x100] sm:$0xff]
    %v619 = vld [vmem:[#allocation12 + $0x108] sm:$0xff]
    %v620 = vld [vmem:[#allocation12 + $0x110] sm:$0xff]
    %v621 = vld [vmem:[#allocation12 + $0x118] sm:$0xff]
    %v622 = vld [vmem:[#allocation12 + $0x120] sm:$0xff]
    %v623 = vld [vmem:[#allocation12 + $0x128] sm:$0xff]
    %v624 = vld [vmem:[#allocation12 + $0x130] sm:$0xff]
    %v625 = vld [vmem:[#allocation12 + $0x138] sm:$0xff]
    %v626 = vld [vmem:[#allocation12 + $0x140] sm:$0xff]
    %v627 = vld [vmem:[#allocation12 + $0x148] sm:$0xff]
    %v628 = vld [vmem:[#allocation12 + $0x150] sm:$0xff]
    %v629 = vld [vmem:[#allocation12 + $0x158] sm:$0xff]
    %v630 = vld [vmem:[#allocation12 + $0x160] sm:$0xff]
    %v631 = vld [vmem:[#allocation12 + $0x168] sm:$0xff]
    %v632 = vld [vmem:[#allocation12 + $0x170] sm:$0xff]
    %v633 = vld [vmem:[#allocation12 + $0x178] sm:$0xff]
    %v634 = vld [vmem:[#allocation12 + $0x180] sm:$0xff]
    %v635 = vld [vmem:[#allocation12 + $0x188] sm:$0xff]
    %v636 = vld [vmem:[#allocation12 + $0x190] sm:$0xff]
    %v637 = vld [vmem:[#allocation12 + $0x198] sm:$0xff]
    %v638 = vld [vmem:[#allocation12 + $0x1a0] sm:$0xff]
    %v639 = vld [vmem:[#allocation12 + $0x1a8] sm:$0xff]
    %v640 = vld [vmem:[#allocation12 + $0x1b0] sm:$0xff]
    %v641 = vld [vmem:[#allocation12 + $0x1b8] sm:$0xff]
    %v642 = vld [vmem:[#allocation12 + $0x1c0] sm:$0xff]
    %v643 = vld [vmem:[#allocation12 + $0x1c8] sm:$0xff]
    %v644 = vld [vmem:[#allocation12 + $0x1d0] sm:$0xff]
    %v645 = vld [vmem:[#allocation12 + $0x1d8] sm:$0xff]
    %v646 = vld [vmem:[#allocation12 + $0x1e0] sm:$0xff]
    %v647 = vld [vmem:[#allocation12 + $0x1e8] sm:$0xff]
    %v648 = vld [vmem:[#allocation12 + $0x1f0] sm:$0xff]
    %v649 = vld [vmem:[#allocation12 + $0x1f8] sm:$0xff]
    %v650 = vld [vmem:[#allocation12 + $0x200] sm:$0xff]
    %v651 = vld [vmem:[#allocation12 + $0x208] sm:$0xff]
    %v652 = vld [vmem:[#allocation12 + $0x210] sm:$0xff]
    %v653 = vld [vmem:[#allocation12 + $0x218] sm:$0xff]
    %v654 = vld [vmem:[#allocation12 + $0x220] sm:$0xff]
    %v655 = vld [vmem:[#allocation12 + $0x228] sm:$0xff]
    %v656 = vld [vmem:[#allocation12 + $0x230] sm:$0xff]
    %v657 = vld [vmem:[#allocation12 + $0x238] sm:$0xff]
    %v658 = vld [vmem:[#allocation12 + $0x240] sm:$0xff]
    %v659 = vld [vmem:[#allocation12 + $0x248] sm:$0xff]
    %v660 = vld [vmem:[#allocation12 + $0x250] sm:$0xff]
    %v661 = vld [vmem:[#allocation12 + $0x258] sm:$0xff]
    %v662 = vld [vmem:[#allocation12 + $0x260] sm:$0xff]
    %v663 = vld [vmem:[#allocation12 + $0x268] sm:$0xff]
    %v664 = vld [vmem:[#allocation12 + $0x270] sm:$0xff]
    %v665 = vld [vmem:[#allocation12 + $0x278] sm:$0xff]
    %v666 = vld [vmem:[%s9] sm:$0x1]
    %v668 = vlaneseq
    %v669 = vshrl.u32 %v668, 7
    %v670 = vsub.s32 0, %v669
    %v671 = vrot.slane %v666, %v670
    %673 = vmatprep.subr.mxu0 0.0
    %674 = vmatpush1.msra.mxu0 %v586
    %675 = vmatprep.subr.mxu0 0.0
    %676 = vmatpush1.msra.mxu0 %v587
    %677 = vmatprep.subr.mxu0 0.0
    %678 = vmatpush1.msra.mxu0 %v588
    %679 = vmatprep.subr.mxu0 0.0
    %680 = vmatpush1.msra.mxu0 %v589
    %681 = vmatprep.subr.mxu0 0.0
    %682 = vmatpush1.msra.mxu0 %v590
    %683 = vmatprep.subr.mxu0 0.0
    %684 = vmatpush1.msra.mxu0 %v591
    %685 = vmatprep.subr.mxu0 0.0
    %686 = vmatpush1.msra.mxu0 %v592
    %687 = vmatprep.subr.mxu0 0.0
    %688 = vmatpush1.msra.mxu0 %v593
    %689 = vmatprep.subr.mxu0 0.0
    %690 = vmatpush1.msra.mxu0 %v594
    %691 = vmatprep.subr.mxu0 0.0
    %692 = vmatpush1.msra.mxu0 %v595
    %693 = vmatprep.subr.mxu0 0.0
    %694 = vmatpush1.msra.mxu0 %v596
    %695 = vmatprep.subr.mxu0 0.0
    %696 = vmatpush1.msra.mxu0 %v597
    %697 = vmatprep.subr.mxu0 0.0
    %698 = vmatpush1.msra.mxu0 %v598
    %699 = vmatprep.subr.mxu0 0.0
    %700 = vmatpush1.msra.mxu0 %v599
    %701 = vmatprep.subr.mxu0 0.0
    %702 = vmatpush1.msra.mxu0 %v600
    %703 = vmatprep.subr.mxu0 0.0
    %704 = vmatpush1.msra.mxu0 %v601
    %705 = vmatprep.subr.mxu0 0.0
    %706 = vmatpush1.msra.mxu0 %v602
    %707 = vmatprep.subr.mxu0 0.0
    %708 = vmatpush1.msra.mxu0 %v603
    %709 = vmatprep.subr.mxu0 0.0
    %710 = vmatpush1.msra.mxu0 %v604
    %711 = vmatprep.subr.mxu0 0.0
    %712 = vmatpush1.msra.mxu0 %v605
    %713 = vmatprep.subr.mxu0 0.0
    %714 = vmatpush1.msra.mxu0 %v606
    %715 = vmatprep.subr.mxu0 0.0
    %716 = vmatpush1.msra.mxu0 %v607
    %717 = vmatprep.subr.mxu0 0.0
    %718 = vmatpush1.msra.mxu0 %v608
    %719 = vmatprep.subr.mxu0 0.0
    %720 = vmatpush1.msra.mxu0 %v609
    %721 = vmatprep.subr.mxu0 0.0
    %722 = vmatpush1.msra.mxu0 %v610
    %723 = vmatprep.subr.mxu0 0.0
    %724 = vmatpush1.msra.mxu0 %v611
    %725 = vmatprep.subr.mxu0 0.0
    %726 = vmatpush1.msra.mxu0 %v612
    %727 = vmatprep.subr.mxu0 0.0
    %728 = vmatpush1.msra.mxu0 %v613
    %729 = vmatprep.subr.mxu0 0.0
    %730 = vmatpush1.msra.mxu0 %v614
    %731 = vmatprep.subr.mxu0 0.0
    %732 = vmatpush1.msra.mxu0 %v615
    %733 = vmatprep.subr.mxu0 0.0
    %734 = vmatpush1.msra.mxu0 %v616
    %735 = vmatprep.subr.mxu0 0.0
    %736 = vmatpush1.msra.mxu0 %v617
    %737 = vmatprep.mubr.f32.mxu0 %v582
    %738 = vmatmul.mubr.f32.gmra.mrb[0].mxu0 %v581
    %v739 = vpop.f32.mrb[0].mxu0
    %v740 = vadd.f32 %v671, %v739
    %v741 = vpop.f32.mrb[0].mxu0
    %742 = vdwg.mxu0
    %743 = vmatprep.subr.mxu0 0.0
    %744 = vmatpush1.msra.mxu0 %v618
    %745 = vmatprep.subr.mxu0 0.0
    %746 = vmatpush1.msra.mxu0 %v619
    %747 = vmatprep.subr.mxu0 0.0
    %748 = vmatpush1.msra.mxu0 %v620
    %749 = vmatprep.subr.mxu0 0.0
    %750 = vmatpush1.msra.mxu0 %v621
    %751 = vmatprep.subr.mxu0 0.0
    %752 = vmatpush1.msra.mxu0 %v622
    %753 = vmatprep.subr.mxu0 0.0
    %754 = vmatpush1.msra.mxu0 %v623
    %755 = vmatprep.subr.mxu0 0.0
    %756 = vmatpush1.msra.mxu0 %v624
    %757 = vmatprep.subr.mxu0 0.0
    %758 = vmatpush1.msra.mxu0 %v625
    %759 = vmatprep.subr.mxu0 0.0
    %760 = vmatpush1.msra.mxu0 %v626
    %761 = vmatprep.subr.mxu0 0.0
    %762 = vmatpush1.msra.mxu0 %v627
    %763 = vmatprep.subr.mxu0 0.0
    %764 = vmatpush1.msra.mxu0 %v628
    %765 = vmatprep.subr.mxu0 0.0
    %766 = vmatpush1.msra.mxu0 %v629
    %767 = vmatprep.subr.mxu0 0.0
    %768 = vmatpush1.msra.mxu0 %v630
    %769 = vmatprep.subr.mxu0 0.0
    %770 = vmatpush1.msra.mxu0 %v631
    %771 = vmatprep.subr.mxu0 0.0
    %772 = vmatpush1.msra.mxu0 %v632
    %773 = vmatprep.subr.mxu0 0.0
    %774 = vmatpush1.msra.mxu0 %v633
    %775 = vmatprep.subr.mxu0 0.0
    %776 = vmatpush1.msra.mxu0 %v634
    %777 = vmatprep.subr.mxu0 0.0
    %778 = vmatpush1.msra.mxu0 %v635
    %779 = vmatprep.subr.mxu0 0.0
    %780 = vmatpush1.msra.mxu0 %v636
    %781 = vmatprep.subr.mxu0 0.0
    %782 = vmatpush1.msra.mxu0 %v637
    %783 = vmatprep.subr.mxu0 0.0
    %784 = vmatpush1.msra.mxu0 %v638
    %785 = vmatprep.subr.mxu0 0.0
    %786 = vmatpush1.msra.mxu0 %v639
    %787 = vmatprep.subr.mxu0 0.0
    %788 = vmatpush1.msra.mxu0 %v640
    %789 = vmatprep.subr.mxu0 0.0
    %790 = vmatpush1.msra.mxu0 %v641
    %791 = vmatprep.subr.mxu0 0.0
    %792 = vmatpush1.msra.mxu0 %v642
    %793 = vmatprep.subr.mxu0 0.0
    %794 = vmatpush1.msra.mxu0 %v643
    %795 = vmatprep.subr.mxu0 0.0
    %796 = vmatpush1.msra.mxu0 %v644
    %797 = vmatprep.subr.mxu0 0.0
    %798 = vmatpush1.msra.mxu0 %v645
    %799 = vmatprep.subr.mxu0 0.0
    %800 = vmatpush1.msra.mxu0 %v646
    %801 = vmatprep.subr.mxu0 0.0
    %802 = vmatpush1.msra.mxu0 %v647
    %803 = vmatprep.subr.mxu0 0.0
    %804 = vmatpush1.msra.mxu0 %v648
    %805 = vmatprep.subr.mxu0 0.0
    %806 = vmatpush1.msra.mxu0 %v649
    %807 = vmatprep.mubr.f32.mxu0 %v584
    %808 = vmatmul.mubr.f32.gmra.mrb[0].mxu0 %v583
    %v809 = vpop.f32.mrb[0].mxu0
    %v810 = vadd.f32 %v740, %v809
    %v811 = vpop.f32.mrb[0].mxu0
    %812 = vdwg.mxu0
    %813 = vmatprep.subr.mxu0 0.0
    %814 = vmatpush1.msra.mxu0 %v650
    %815 = vmatprep.subr.mxu0 0.0
    %816 = vmatpush1.msra.mxu0 %v651
    %817 = vmatprep.subr.mxu0 0.0
    %818 = vmatpush1.msra.mxu0 %v652
    %819 = vmatprep.subr.mxu0 0.0
    %820 = vmatpush1.msra.mxu0 %v653
    %821 = vmatprep.subr.mxu0 0.0
    %822 = vmatpush1.msra.mxu0 %v654
    %823 = vmatprep.subr.mxu0 0.0
    %824 = vmatpush1.msra.mxu0 %v655
    %825 = vmatprep.subr.mxu0 0.0
    %826 = vmatpush1.msra.mxu0 %v656
    %827 = vmatprep.subr.mxu0 0.0
    %828 = vmatpush1.msra.mxu0 %v657
    %829 = vmatprep.subr.mxu0 0.0
    %830 = vmatpush1.msra.mxu0 %v658
    %831 = vmatprep.subr.mxu0 0.0
    %832 = vmatpush1.msra.mxu0 %v659
    %833 = vmatprep.subr.mxu0 0.0
    %834 = vmatpush1.msra.mxu0 %v660
    %835 = vmatprep.subr.mxu0 0.0
    %836 = vmatpush1.msra.mxu0 %v661
    %837 = vmatprep.subr.mxu0 0.0
    %838 = vmatpush1.msra.mxu0 %v662
    %839 = vmatprep.subr.mxu0 0.0
    %840 = vmatpush1.msra.mxu0 %v663
    %841 = vmatprep.subr.mxu0 0.0
    %842 = vmatpush1.msra.mxu0 %v664
    %843 = vmatprep.subr.mxu0 0.0
    %844 = vmatpush1.msra.mxu0 %v665
    %845 = vmatprep.subr.mxu0 0.0
    %846 = vmatpush1.msra.mxu0 0.0
    %847 = vmatprep.subr.mxu0 0.0
    %848 = vmatpush1.msra.mxu0 0.0
    %849 = vmatprep.subr.mxu0 0.0
    %850 = vmatpush1.msra.mxu0 0.0
    %851 = vmatprep.subr.mxu0 0.0
    %852 = vmatpush1.msra.mxu0 0.0
    %853 = vmatprep.subr.mxu0 0.0
    %854 = vmatpush1.msra.mxu0 0.0
    %855 = vmatprep.subr.mxu0 0.0
    %856 = vmatpush1.msra.mxu0 0.0
    %857 = vmatprep.subr.mxu0 0.0
    %858 = vmatpush1.msra.mxu0 0.0
    %859 = vmatprep.subr.mxu0 0.0
    %860 = vmatpush1.msra.mxu0 0.0
    %861 = vmatprep.subr.mxu0 0.0
    %862 = vmatpush1.msra.mxu0 0.0
    %863 = vmatprep.subr.mxu0 0.0
    %864 = vmatpush1.msra.mxu0 0.0
    %865 = vmatprep.subr.mxu0 0.0
    %866 = vmatpush1.msra.mxu0 0.0
    %867 = vmatprep.subr.mxu0 0.0
    %868 = vmatpush1.msra.mxu0 0.0
    %869 = vmatprep.subr.mxu0 0.0
    %870 = vmatpush1.msra.mxu0 0.0
    %871 = vmatprep.subr.mxu0 0.0
    %872 = vmatpush1.msra.mxu0 0.0
    %873 = vmatprep.subr.mxu0 0.0
    %874 = vmatpush1.msra.mxu0 0.0
    %875 = vmatprep.subr.mxu0 0.0
    %876 = vmatpush1.msra.mxu0 0.0
    %877 = vmatprep.mubr.f32.mxu0 0.0
    %878 = vmatmul.mubr.f32.gmra.mrb[0].mxu0 %v585
    %v879 = vpop.f32.mrb[0].mxu0
    %v880 = vadd.f32 %v810, %v879
    %v881 = vpop.f32.mrb[0].mxu0
    %882 = vdwg.mxu0
    %v883 = vxor.u32 %v880, 2147483648
    %v884 = vmul.f32 %v883, 1.442695
    %v885 = vpow.pop %v884
    %v886 = vadd.f32 %v885, 1.0
    %v887 = vrcp.pop %v886
    %v888 = vmul.f32 1.0, %v887
    %v889 = vmul.f32 %v880, %v888
    %890 = vst [vmem:[#allocation2 + $0x28] sm:$0xff] %v889
    %v891 = vld [vmem:[#allocation2] sm:$0xff]
    %v892 = vld [vmem:[#allocation2 + $0x8] sm:$0xff]
    %v893 = vld [vmem:[#allocation2 + $0x10] sm:$0xff]
    %v894 = vld [vmem:[#allocation2 + $0x18] sm:$0xff]
    %v895 = vld [vmem:[#allocation2 + $0x20] sm:$0xff]
    %v896 = vld [vmem:[#allocation2 + $0x28] sm:$0xff]
    %v897 = vld [vmem:[#allocation14] sm:$0xff]
    %v898 = vld [vmem:[#allocation14 + $0x8] sm:$0xff]
    %v899 = vld [vmem:[#allocation14 + $0x10] sm:$0xff]
    %v900 = vld [vmem:[#allocation14 + $0x18] sm:$0xff]
    %v901 = vld [vmem:[#allocation14 + $0x20] sm:$0xff]
    %v902 = vld [vmem:[#allocation14 + $0x28] sm:$0xff]
    %v903 = vld [vmem:[#allocation14 + $0x30] sm:$0xff]
    %v904 = vld [vmem:[#allocation14 + $0x38] sm:$0xff]
    %v905 = vld [vmem:[#allocation14 + $0x40] sm:$0xff]
    %v906 = vld [vmem:[#allocation14 + $0x48] sm:$0xff]
    %v907 = vld [vmem:[#allocation14 + $0x50] sm:$0xff]
    %v908 = vld [vmem:[#allocation14 + $0x58] sm:$0xff]
    %v909 = vld [vmem:[#allocation14 + $0x60] sm:$0xff]
    %v910 = vld [vmem:[#allocation14 + $0x68] sm:$0xff]
    %v911 = vld [vmem:[#allocation14 + $0x70] sm:$0xff]
    %v912 = vld [vmem:[#allocation14 + $0x78] sm:$0xff]
    %v913 = vld [vmem:[#allocation14 + $0x80] sm:$0xff]
    %v914 = vld [vmem:[#allocation14 + $0x88] sm:$0xff]
    %v915 = vld [vmem:[#allocation14 + $0x90] sm:$0xff]
    %v916 = vld [vmem:[#allocation14 + $0x98] sm:$0xff]
    %v917 = vld [vmem:[#allocation14 + $0xa0] sm:$0xff]
    %v918 = vld [vmem:[#allocation14 + $0xa8] sm:$0xff]
    %v919 = vld [vmem:[#allocation14 + $0xb0] sm:$0xff]
    %v920 = vld [vmem:[#allocation14 + $0xb8] sm:$0xff]
    %v921 = vld [vmem:[#allocation14 + $0xc0] sm:$0xff]
    %v922 = vld [vmem:[#allocation14 + $0xc8] sm:$0xff]
    %v923 = vld [vmem:[#allocation14 + $0xd0] sm:$0xff]
    %v924 = vld [vmem:[#allocation14 + $0xd8] sm:$0xff]
    %v925 = vld [vmem:[#allocation14 + $0xe0] sm:$0xff]
    %v926 = vld [vmem:[#allocation14 + $0xe8] sm:$0xff]
    %v927 = vld [vmem:[#allocation14 + $0xf0] sm:$0xff]
    %v928 = vld [vmem:[#allocation14 + $0xf8] sm:$0xff]
    %v929 = vld [vmem:[#allocation14 + $0x100] sm:$0xff]
    %v930 = vld [vmem:[#allocation14 + $0x108] sm:$0xff]
    %v931 = vld [vmem:[#allocation14 + $0x110] sm:$0xff]
    %v932 = vld [vmem:[#allocation14 + $0x118] sm:$0xff]
    %v933 = vld [vmem:[#allocation14 + $0x120] sm:$0xff]
    %v934 = vld [vmem:[#allocation14 + $0x128] sm:$0xff]
    %v935 = vld [vmem:[#allocation14 + $0x130] sm:$0xff]
    %v936 = vld [vmem:[#allocation14 + $0x138] sm:$0xff]
    %v937 = vld [vmem:[#allocation14 + $0x140] sm:$0xff]
    %v938 = vld [vmem:[#allocation14 + $0x148] sm:$0xff]
    %v939 = vld [vmem:[#allocation14 + $0x150] sm:$0xff]
    %v940 = vld [vmem:[#allocation14 + $0x158] sm:$0xff]
    %v941 = vld [vmem:[#allocation14 + $0x160] sm:$0xff]
    %v942 = vld [vmem:[#allocation14 + $0x168] sm:$0xff]
    %v943 = vld [vmem:[#allocation14 + $0x170] sm:$0xff]
    %v944 = vld [vmem:[#allocation14 + $0x178] sm:$0xff]
    %v945 = vld [vmem:[#allocation14 + $0x180] sm:$0xff]
    %v946 = vld [vmem:[#allocation14 + $0x188] sm:$0xff]
    %v947 = vld [vmem:[#allocation14 + $0x190] sm:$0xff]
    %v948 = vld [vmem:[#allocation14 + $0x198] sm:$0xff]
    %v949 = vld [vmem:[#allocation14 + $0x1a0] sm:$0xff]
    %v950 = vld [vmem:[#allocation14 + $0x1a8] sm:$0xff]
    %v951 = vld [vmem:[#allocation14 + $0x1b0] sm:$0xff]
    %v952 = vld [vmem:[#allocation14 + $0x1b8] sm:$0xff]
    %v953 = vld [vmem:[#allocation14 + $0x1c0] sm:$0xff]
    %v954 = vld [vmem:[#allocation14 + $0x1c8] sm:$0xff]
    %v955 = vld [vmem:[#allocation14 + $0x1d0] sm:$0xff]
    %v956 = vld [vmem:[#allocation14 + $0x1d8] sm:$0xff]
    %v957 = vld [vmem:[#allocation14 + $0x1e0] sm:$0xff]
    %v958 = vld [vmem:[#allocation14 + $0x1e8] sm:$0xff]
    %v959 = vld [vmem:[#allocation14 + $0x1f0] sm:$0xff]
    %v960 = vld [vmem:[#allocation14 + $0x1f8] sm:$0xff]
    %v961 = vld [vmem:[#allocation14 + $0x200] sm:$0xff]
    %v962 = vld [vmem:[#allocation14 + $0x208] sm:$0xff]
    %v963 = vld [vmem:[#allocation14 + $0x210] sm:$0xff]
    %v964 = vld [vmem:[#allocation14 + $0x218] sm:$0xff]
    %v965 = vld [vmem:[#allocation14 + $0x220] sm:$0xff]
    %v966 = vld [vmem:[#allocation14 + $0x228] sm:$0xff]
    %v967 = vld [vmem:[#allocation14 + $0x230] sm:$0xff]
    %v968 = vld [vmem:[#allocation14 + $0x238] sm:$0xff]
    %v969 = vld [vmem:[#allocation14 + $0x240] sm:$0xff]
    %v970 = vld [vmem:[#allocation14 + $0x248] sm:$0xff]
    %v971 = vld [vmem:[#allocation14 + $0x250] sm:$0xff]
    %v972 = vld [vmem:[#allocation14 + $0x258] sm:$0xff]
    %v973 = vld [vmem:[#allocation14 + $0x260] sm:$0xff]
    %v974 = vld [vmem:[#allocation14 + $0x268] sm:$0xff]
    %v975 = vld [vmem:[#allocation14 + $0x270] sm:$0xff]
    %v976 = vld [vmem:[#allocation14 + $0x278] sm:$0xff]
    %v977 = vld [vmem:[#allocation14 + $0x280] sm:$0xff]
    %v978 = vld [vmem:[#allocation14 + $0x288] sm:$0xff]
    %v979 = vld [vmem:[#allocation14 + $0x290] sm:$0xff]
    %v980 = vld [vmem:[#allocation14 + $0x298] sm:$0xff]
    %v981 = vld [vmem:[#allocation14 + $0x2a0] sm:$0xff]
    %v982 = vld [vmem:[#allocation14 + $0x2a8] sm:$0xff]
    %v983 = vld [vmem:[#allocation14 + $0x2b0] sm:$0xff]
    %v984 = vld [vmem:[#allocation14 + $0x2b8] sm:$0xff]
    %v985 = vld [vmem:[#allocation14 + $0x2c0] sm:$0xff]
    %v986 = vld [vmem:[#allocation14 + $0x2c8] sm:$0xff]
    %v987 = vld [vmem:[#allocation14 + $0x2d0] sm:$0xff]
    %v988 = vld [vmem:[#allocation14 + $0x2d8] sm:$0xff]
    %v989 = vld [vmem:[#allocation14 + $0x2e0] sm:$0xff]
    %v990 = vld [vmem:[#allocation14 + $0x2e8] sm:$0xff]
    %v991 = vld [vmem:[#allocation14 + $0x2f0] sm:$0xff]
    %v992 = vld [vmem:[#allocation14 + $0x2f8] sm:$0xff]
    %v993 = vld [vmem:[%s11] sm:$0x1]
    %v995 = vlaneseq
    %v996 = vshrl.u32 %v995, 7
    %v997 = vsub.s32 0, %v996
    %v998 = vrot.slane %v993, %v997
    %1000 = vmatprep.subr.mxu0 0.0
    %1001 = vmatpush1.msra.mxu0 %v897
    %1002 = vmatprep.subr.mxu0 0.0
    %1003 = vmatpush1.msra.mxu0 %v898
    %1004 = vmatprep.subr.mxu0 0.0
    %1005 = vmatpush1.msra.mxu0 %v899
    %1006 = vmatprep.subr.mxu0 0.0
    %1007 = vmatpush1.msra.mxu0 %v900
    %1008 = vmatprep.subr.mxu0 0.0
    %1009 = vmatpush1.msra.mxu0 %v901
    %1010 = vmatprep.subr.mxu0 0.0
    %1011 = vmatpush1.msra.mxu0 %v902
    %1012 = vmatprep.subr.mxu0 0.0
    %1013 = vmatpush1.msra.mxu0 %v903
    %1014 = vmatprep.subr.mxu0 0.0
    %1015 = vmatpush1.msra.mxu0 %v904
    %1016 = vmatprep.subr.mxu0 0.0
    %1017 = vmatpush1.msra.mxu0 %v905
    %1018 = vmatprep.subr.mxu0 0.0
    %1019 = vmatpush1.msra.mxu0 %v906
    %1020 = vmatprep.subr.mxu0 0.0
    %1021 = vmatpush1.msra.mxu0 %v907
    %1022 = vmatprep.subr.mxu0 0.0
    %1023 = vmatpush1.msra.mxu0 %v908
    %1024 = vmatprep.subr.mxu0 0.0
    %1025 = vmatpush1.msra.mxu0 %v909
    %1026 = vmatprep.subr.mxu0 0.0
    %1027 = vmatpush1.msra.mxu0 %v910
    %1028 = vmatprep.subr.mxu0 0.0
    %1029 = vmatpush1.msra.mxu0 %v911
    %1030 = vmatprep.subr.mxu0 0.0
    %1031 = vmatpush1.msra.mxu0 %v912
    %1032 = vmatprep.subr.mxu0 0.0
    %1033 = vmatpush1.msra.mxu0 %v913
    %1034 = vmatprep.subr.mxu0 0.0
    %1035 = vmatpush1.msra.mxu0 %v914
    %1036 = vmatprep.subr.mxu0 0.0
    %1037 = vmatpush1.msra.mxu0 %v915
    %1038 = vmatprep.subr.mxu0 0.0
    %1039 = vmatpush1.msra.mxu0 %v916
    %1040 = vmatprep.subr.mxu0 0.0
    %1041 = vmatpush1.msra.mxu0 %v917
    %1042 = vmatprep.subr.mxu0 0.0
    %1043 = vmatpush1.msra.mxu0 %v918
    %1044 = vmatprep.subr.mxu0 0.0
    %1045 = vmatpush1.msra.mxu0 %v919
    %1046 = vmatprep.subr.mxu0 0.0
    %1047 = vmatpush1.msra.mxu0 %v920
    %1048 = vmatprep.subr.mxu0 0.0
    %1049 = vmatpush1.msra.mxu0 %v921
    %1050 = vmatprep.subr.mxu0 0.0
    %1051 = vmatpush1.msra.mxu0 %v922
    %1052 = vmatprep.subr.mxu0 0.0
    %1053 = vmatpush1.msra.mxu0 %v923
    %1054 = vmatprep.subr.mxu0 0.0
    %1055 = vmatpush1.msra.mxu0 %v924
    %1056 = vmatprep.subr.mxu0 0.0
    %1057 = vmatpush1.msra.mxu0 %v925
    %1058 = vmatprep.subr.mxu0 0.0
    %1059 = vmatpush1.msra.mxu0 %v926
    %1060 = vmatprep.subr.mxu0 0.0
    %1061 = vmatpush1.msra.mxu0 %v927
    %1062 = vmatprep.subr.mxu0 0.0
    %1063 = vmatpush1.msra.mxu0 %v928
    %1064 = vmatprep.mubr.f32.mxu0 %v892
    %1065 = vmatmul.mubr.f32.gmra.mrb[0].mxu0 %v891
    %v1066 = vpop.f32.mrb[0].mxu0
    %v1067 = vadd.f32 %v998, %v1066
    %v1068 = vpop.f32.mrb[0].mxu0
    %1069 = vdwg.mxu0
    %1070 = vmatprep.subr.mxu0 0.0
    %1071 = vmatpush1.msra.mxu0 %v929
    %1072 = vmatprep.subr.mxu0 0.0
    %1073 = vmatpush1.msra.mxu0 %v930
    %1074 = vmatprep.subr.mxu0 0.0
    %1075 = vmatpush1.msra.mxu0 %v931
    %1076 = vmatprep.subr.mxu0 0.0
    %1077 = vmatpush1.msra.mxu0 %v932
    %1078 = vmatprep.subr.mxu0 0.0
    %1079 = vmatpush1.msra.mxu0 %v933
    %1080 = vmatprep.subr.mxu0 0.0
    %1081 = vmatpush1.msra.mxu0 %v934
    %1082 = vmatprep.subr.mxu0 0.0
    %1083 = vmatpush1.msra.mxu0 %v935
    %1084 = vmatprep.subr.mxu0 0.0
    %1085 = vmatpush1.msra.mxu0 %v936
    %1086 = vmatprep.subr.mxu0 0.0
    %1087 = vmatpush1.msra.mxu0 %v937
    %1088 = vmatprep.subr.mxu0 0.0
    %1089 = vmatpush1.msra.mxu0 %v938
    %1090 = vmatprep.subr.mxu0 0.0
    %1091 = vmatpush1.msra.mxu0 %v939
    %1092 = vmatprep.subr.mxu0 0.0
    %1093 = vmatpush1.msra.mxu0 %v940
    %1094 = vmatprep.subr.mxu0 0.0
    %1095 = vmatpush1.msra.mxu0 %v941
    %1096 = vmatprep.subr.mxu0 0.0
    %1097 = vmatpush1.msra.mxu0 %v942
    %1098 = vmatprep.subr.mxu0 0.0
    %1099 = vmatpush1.msra.mxu0 %v943
    %1100 = vmatprep.subr.mxu0 0.0
    %1101 = vmatpush1.msra.mxu0 %v944
    %1102 = vmatprep.subr.mxu0 0.0
    %1103 = vmatpush1.msra.mxu0 %v945
    %1104 = vmatprep.subr.mxu0 0.0
    %1105 = vmatpush1.msra.mxu0 %v946
    %1106 = vmatprep.subr.mxu0 0.0
    %1107 = vmatpush1.msra.mxu0 %v947
    %1108 = vmatprep.subr.mxu0 0.0
    %1109 = vmatpush1.msra.mxu0 %v948
    %1110 = vmatprep.subr.mxu0 0.0
    %1111 = vmatpush1.msra.mxu0 %v949
    %1112 = vmatprep.subr.mxu0 0.0
    %1113 = vmatpush1.msra.mxu0 %v950
    %1114 = vmatprep.subr.mxu0 0.0
    %1115 = vmatpush1.msra.mxu0 %v951
    %1116 = vmatprep.subr.mxu0 0.0
    %1117 = vmatpush1.msra.mxu0 %v952
    %1118 = vmatprep.subr.mxu0 0.0
    %1119 = vmatpush1.msra.mxu0 %v953
    %1120 = vmatprep.subr.mxu0 0.0
    %1121 = vmatpush1.msra.mxu0 %v954
    %1122 = vmatprep.subr.mxu0 0.0
    %1123 = vmatpush1.msra.mxu0 %v955
    %1124 = vmatprep.subr.mxu0 0.0
    %1125 = vmatpush1.msra.mxu0 %v956
    %1126 = vmatprep.subr.mxu0 0.0
    %1127 = vmatpush1.msra.mxu0 %v957
    %1128 = vmatprep.subr.mxu0 0.0
    %1129 = vmatpush1.msra.mxu0 %v958
    %1130 = vmatprep.subr.mxu0 0.0
    %1131 = vmatpush1.msra.mxu0 %v959
    %1132 = vmatprep.subr.mxu0 0.0
    %1133 = vmatpush1.msra.mxu0 %v960
    %1134 = vmatprep.mubr.f32.mxu0 %v894
    %1135 = vmatmul.mubr.f32.gmra.mrb[0].mxu0 %v893
    %v1136 = vpop.f32.mrb[0].mxu0
    %v1137 = vadd.f32 %v1067, %v1136
    %v1138 = vpop.f32.mrb[0].mxu0
    %1139 = vdwg.mxu0
    %1140 = vmatprep.subr.mxu0 0.0
    %1141 = vmatpush1.msra.mxu0 %v961
    %1142 = vmatprep.subr.mxu0 0.0
    %1143 = vmatpush1.msra.mxu0 %v962
    %1144 = vmatprep.subr.mxu0 0.0
    %1145 = vmatpush1.msra.mxu0 %v963
    %1146 = vmatprep.subr.mxu0 0.0
    %1147 = vmatpush1.msra.mxu0 %v964
    %1148 = vmatprep.subr.mxu0 0.0
    %1149 = vmatpush1.msra.mxu0 %v965
    %1150 = vmatprep.subr.mxu0 0.0
    %1151 = vmatpush1.msra.mxu0 %v966
    %1152 = vmatprep.subr.mxu0 0.0
    %1153 = vmatpush1.msra.mxu0 %v967
    %1154 = vmatprep.subr.mxu0 0.0
    %1155 = vmatpush1.msra.mxu0 %v968
    %1156 = vmatprep.subr.mxu0 0.0
    %1157 = vmatpush1.msra.mxu0 %v969
    %1158 = vmatprep.subr.mxu0 0.0
    %1159 = vmatpush1.msra.mxu0 %v970
    %1160 = vmatprep.subr.mxu0 0.0
    %1161 = vmatpush1.msra.mxu0 %v971
    %1162 = vmatprep.subr.mxu0 0.0
    %1163 = vmatpush1.msra.mxu0 %v972
    %1164 = vmatprep.subr.mxu0 0.0
    %1165 = vmatpush1.msra.mxu0 %v973
    %1166 = vmatprep.subr.mxu0 0.0
    %1167 = vmatpush1.msra.mxu0 %v974
    %1168 = vmatprep.subr.mxu0 0.0
    %1169 = vmatpush1.msra.mxu0 %v975
    %1170 = vmatprep.subr.mxu0 0.0
    %1171 = vmatpush1.msra.mxu0 %v976
    %1172 = vmatprep.subr.mxu0 0.0
    %1173 = vmatpush1.msra.mxu0 %v977
    %1174 = vmatprep.subr.mxu0 0.0
    %1175 = vmatpush1.msra.mxu0 %v978
    %1176 = vmatprep.subr.mxu0 0.0
    %1177 = vmatpush1.msra.mxu0 %v979
    %1178 = vmatprep.subr.mxu0 0.0
    %1179 = vmatpush1.msra.mxu0 %v980
    %1180 = vmatprep.subr.mxu0 0.0
    %1181 = vmatpush1.msra.mxu0 %v981
    %1182 = vmatprep.subr.mxu0 0.0
    %1183 = vmatpush1.msra.mxu0 %v982
    %1184 = vmatprep.subr.mxu0 0.0
    %1185 = vmatpush1.msra.mxu0 %v983
    %1186 = vmatprep.subr.mxu0 0.0
    %1187 = vmatpush1.msra.mxu0 %v984
    %1188 = vmatprep.subr.mxu0 0.0
    %1189 = vmatpush1.msra.mxu0 %v985
    %1190 = vmatprep.subr.mxu0 0.0
    %1191 = vmatpush1.msra.mxu0 %v986
    %1192 = vmatprep.subr.mxu0 0.0
    %1193 = vmatpush1.msra.mxu0 %v987
    %1194 = vmatprep.subr.mxu0 0.0
    %1195 = vmatpush1.msra.mxu0 %v988
    %1196 = vmatprep.subr.mxu0 0.0
    %1197 = vmatpush1.msra.mxu0 %v989
    %1198 = vmatprep.subr.mxu0 0.0
    %1199 = vmatpush1.msra.mxu0 %v990
    %1200 = vmatprep.subr.mxu0 0.0
    %1201 = vmatpush1.msra.mxu0 %v991
    %1202 = vmatprep.subr.mxu0 0.0
    %1203 = vmatpush1.msra.mxu0 %v992
    %1204 = vmatprep.mubr.f32.mxu0 %v896
    %1205 = vmatmul.mubr.f32.gmra.mrb[0].mxu0 %v895
    %v1206 = vpop.f32.mrb[0].mxu0
    %v1207 = vadd.f32 %v1137, %v1206
    %v1208 = vpop.f32.mrb[0].mxu0
    %1209 = vdwg.mxu0
    %1210 = vst [vmem:[#allocation15] sm:$0xff] %v1207
    // Predicated region
    $region78: #{tpu_custom_call.1} parent=1 // pred_check
      _
    $region79: #{tpu_custom_call.1} parent=1 // pred_check_branch
      %1212 = sbr.rel (0) target = $region81
    $region80: #{tpu_custom_call.1} parent=1 // pred_region
      %s1214 = ssub.s32 128, 128
      %1215 = vsyncadd [#allocation5], %s1214
      %s1217 = sshll.u32 [#allocation15], 4
      %s1218 = int_to_ptr.vmem [resolvable:$true] %s1217
      %1220 = dma.vmem_to_hbm [thread:$0]  %s1218, 128, %s12, [#allocation5]
    $region81: #{tpu_custom_call.1} parent=1 // pred_fallthru
      _
    // Predicated region
    $region82: #{tpu_custom_call.1} parent=1 // pred_check
      _
    $region83: #{tpu_custom_call.1} parent=1 // pred_check_branch
      %1222 = sbr.rel (0) target = $region85
    $region84: #{tpu_custom_call.1} parent=1 // pred_region
      %1223 = dma.done [#allocation5], 128
    $region85: #{tpu_custom_call.1} parent=1 // pred_fallthru
      _
    %1224 = vsyncpa [#allocation4], 1
    %1225 = vsyncpa [#allocation7], 1
    %1226 = vsyncpa [#allocation10], 1
    %1227 = vsyncpa [#allocation13], 1
    %1228 = vsyncpa [#allocation5], 1

</llo_original>
